<compile_context>
chip_gen: v5e
topology: v5e:2x2
jax: 0.10.0
libtpu: 0.0.40
codegen_flags: <defaults>
</compile_context>

<pallas_src>
import functools

import jax
import jax.numpy as jnp
from jax.experimental import pallas as pl
from jax.experimental.pallas import tpu as pltpu


def _round_up(a, b):
    return (a + b - 1) // b * b


# ----------------------------- parameter init ------------------------------
def get_weight_jax(key, out_planes, in_planes, ks=7):
    """JAX re-implementation of get_weight(): 3 masked random 7x7 kernels."""
    k1, k2, k3 = jax.random.split(key, 3)
    shape = (out_planes, in_planes, ks, ks)
    w1 = jax.random.normal(k1, shape, jnp.float32)
    w2 = jax.random.normal(k2, shape, jnp.float32)
    w3 = jax.random.normal(k3, shape, jnp.float32)

    r = jnp.arange(ks)
    keep1 = (r >= 2) & (r <= 4)                 # zero rows/cols 0,1,5,6
    keep2 = (r % 2) == 1                        # zero rows/cols 0,2,4,6
    keep3 = (r == 0) | (r == 3) | (r == 6)      # zero rows/cols 1,2,4,5

    mask1 = (keep1[:, None] & keep1[None, :]).astype(jnp.float32)
    mask2 = (keep2[:, None] & keep2[None, :]).astype(jnp.float32)
    mask3 = (keep3[:, None] & keep3[None, :]).astype(jnp.float32)

    return jnp.stack([w1 * mask1, w2 * mask2, w3 * mask3], axis=0)  # (K=3,out,in,ks,ks)


# -------------------------------- kernel -----------------------------------
def asconv_kernel(x_ref, attw_ref, attb_ref, wbase_ref, out_ref,
                  *, hw, Wp, ks, cin_p, cout, K, out_lanes):
    """One sample per grid step.

    x_ref    : (1, cin_p, L)              zero-padded image, rows flattened
    attw_ref : (cin_p, K)                 1x1 attention conv weight (transposed)
    attb_ref : (1, K)                     attention bias
    wbase_ref: (K, cout, ks*ks*cin_p)     the K masked base kernels (lane-dense)
    out_ref  : (1, cout, out_lanes)       flattened output in padded-row coords
    """
    xf = x_ref[0]                                        # (cin_p, L)

    # 1) attention: global avg-pool -> 1x1 conv -> sigmoid (VPU/XLU only).
    #    Padded regions are zero so sum/ (H*W) == true mean.
    xsum = jnp.sum(xf, axis=1, keepdims=True)            # (cin_p, 1)
    logit = jnp.sum(xsum * attw_ref[...], axis=0, keepdims=True) * (1.0 / hw)
    att = jax.nn.sigmoid(logit + attb_ref[...])          # (1, K)

    # 2) aggregate the K base kernels with attention weights: K FMAs on the
    #    VPU instead of a degenerate (1,K)x(K,...) MXU contraction.
    w_agg = att[:, 0:1] * wbase_ref[0]                   # (cout, ks*ks*cin_p)
    for k in range(1, K):
        w_agg = w_agg + att[:, k:k + 1] * wbase_ref[k]

    # 3) "same" conv as ks row-matmuls: (cout, ks*cin_p) x (ks*cin_p, out_lanes)
    #    accumulated in f32.  Tap (kh, kw) == lane shift of kh*Wp + kw in the
    #    flattened padded image; spatial coords stay in the lane dim.
    row_k = ks * cin_p
    acc = jnp.zeros((cout, out_lanes), jnp.float32)
    for kh in range(ks):
        base = kh * Wp
        blk = jnp.concatenate(
            [xf[:, base + kw: base + kw + out_lanes] for kw in range(ks)],
            axis=0)                                      # (ks*cin_p, out_lanes)
        wk = w_agg[:, kh * row_k:(kh + 1) * row_k]       # (cout, ks*cin_p)
        acc = acc + jnp.dot(wk, blk, preferred_element_type=jnp.float32)

    out_ref[0] = acc.astype(out_ref.dtype)


# ------------------------------- wrapper ------------------------------------
def asconv_forward(x_nchw, attw, attb, weight, *, ks, padding):
    """weight: (K, out, in, ks, ks); attw: (K, in); attb: (K,). x: NCHW."""
    N, cin, H, W = x_nchw.shape
    K, cout = weight.shape[0], weight.shape[1]
    assert padding == (ks - 1) // 2, "only stride=1 'same' configuration supported"

    Hp, Wp = H + 2 * padding, W + 2 * padding
    cin_p = _round_up(cin, 8)                    # sublane-align channels
    tap = ks * ks * cin_p

    # lane-dense output width (multiple of 128) in padded-row coordinates
    out_lanes = _round_up(H * Wp, 128)
    max_off = (ks - 1) * Wp + (ks - 1)
    L = _round_up(out_lanes + max_off, 128)      # flattened-input lane width

    # --- prepare inputs (channel pad -> spatial pad -> flatten -> tail pad) ---
    xpad = jnp.pad(x_nchw, ((0, 0), (0, cin_p - cin),
                            (padding, padding), (padding, padding)))
    xflat = xpad.reshape(N, cin_p, Hp * Wp)
    xflat = jnp.pad(xflat, ((0, 0), (0, 0), (0, L - Hp * Wp)))

    # (K,out,in,ks,ks) -> pad in -> (K,out,ks,ks,in_p) -> (K, out, ks*ks*in_p)
    wpad = jnp.pad(weight, ((0, 0), (0, 0), (0, cin_p - cin), (0, 0), (0, 0)))
    wbase = jnp.transpose(wpad, (0, 1, 3, 4, 2)).reshape(K, cout, tap)

    attw_t = jnp.pad(attw, ((0, 0), (0, cin_p - cin))).T          # (cin_p, K)
    attb2 = attb.reshape(1, K)

    kernel = functools.partial(asconv_kernel, hw=float(H * W), Wp=Wp, ks=ks,
                               cin_p=cin_p, cout=cout, K=K, out_lanes=out_lanes)

    flops = 2 * N * H * W * ks * ks * cin * cout
    bytes_accessed = 4 * (N * cin_p * L + N * cout * out_lanes
                          + K * cout * tap + cin_p * K + K)

    out_flat = pl.pallas_call(
        kernel,
        out_shape=jax.ShapeDtypeStruct((N, cout, out_lanes), x_nchw.dtype),
        grid=(N,),
        in_specs=[
            pl.BlockSpec((1, cin_p, L), lambda n: (n, 0, 0)),
            pl.BlockSpec((cin_p, K), lambda n: (0, 0)),
            pl.BlockSpec((1, K), lambda n: (0, 0)),
            pl.BlockSpec((K, cout, tap), lambda n: (0, 0, 0)),
        ],
        out_specs=pl.BlockSpec((1, cout, out_lanes), lambda n: (n, 0, 0)),
        compiler_params=pltpu.CompilerParams(
            dimension_semantics=("parallel",)),
        cost_estimate=pl.CostEstimate(flops=flops,
                                      transcendentals=N * K,
                                      bytes_accessed=bytes_accessed),
    )(xflat, attw_t, attb2, wbase)

    # drop the padded-row garbage columns; reshape back to NCHW
    out = out_flat[:, :, :H * Wp].reshape(N, cout, H, Wp)[:, :, :, :W]
    return out


# ------------------------------ pure-JAX ref --------------------------------
def asconv_reference(x, attw, attb, weight, *, ks, padding):
    N, cin, H, W = x.shape
    K, cout = weight.shape[0], weight.shape[1]
    mean_x = jnp.mean(x, axis=(2, 3))                                 # (N, Cin)
    att = jax.nn.sigmoid(mean_x @ attw.T + attb[None, :])             # (N, K)
    agg = (att @ weight.reshape(K, -1)).reshape(N, cout, cin, ks, ks)
    outs = []
    for n in range(N):
        o = jax.lax.conv_general_dilated(
            x[n:n + 1], agg[n], window_strides=(1, 1),
            padding=[(padding, padding), (padding, padding)],
            dimension_numbers=("NCHW", "OIHW", "NCHW"))
        outs.append(o)
    return jnp.concatenate(outs, axis=0)


# --------------------------------- main -------------------------------------
if __name__ == "__main__":
    N, cin, cout, H, W = 2, 4, 8, 16, 16
    ks, K, padding = 7, 3, 3   # K=3: the 3 masked weight variants (stride=1 "same")

    key = jax.random.PRNGKey(0)
    kx, kw, ka, kb = jax.random.split(key, 4)
    x = jax.random.normal(kx, (N, cin, H, W), jnp.float32)
    weight = get_weight_jax(kw, cout, cin, ks)                 # (K, out, in, 7, 7)
    attw = 0.1 * jax.random.normal(ka, (K, cin), jnp.float32)  # 1x1 conv weight
    attb = 0.1 * jax.random.normal(kb, (K,), jnp.float32)      # 1x1 conv bias

    out = asconv_forward(x, attw, attb, weight, ks=ks, padding=padding)
    out = jax.block_until_ready(out)

    ref = asconv_reference(x, attw, attb, weight, ks=ks, padding=padding)
    assert out.shape == (N, cout, H, W)
    assert jnp.allclose(out, ref, atol=1e-3, rtol=1e-3), "mismatch vs reference"

    print("KERNEL_OK")
</pallas_src>

<mosaic_0001>
module attributes {stable_mosaic.version = 11 : i64} {
  func.func @asconv_kernel(%arg0: i32, %arg1: memref<1x8x640xf32, #tpu.memory_space<vmem>>, %arg2: memref<8x3xf32, #tpu.memory_space<vmem>>, %arg3: memref<1x3xf32, #tpu.memory_space<vmem>>, %arg4: memref<3x8x392xf32, #tpu.memory_space<vmem>>, %arg5: memref<1x8x384xf32, #tpu.memory_space<vmem>>) attributes {dimension_semantics = [#tpu.dimension_semantics<parallel>], iteration_bounds = array<i64: 2>, scalar_prefetch = 0 : i64, scratch_operands = 0 : i64, tpu.core_type = #tpu.core_type<tc>, window_params = [{transform_indices = @transform_0, window_bounds = array<i64: 1, 8, 640>}, {pipeline_mode = #tpu.pipeline_mode<synchronous>, transform_indices = @transform_1, window_bounds = array<i64: 8, 3>}, {pipeline_mode = #tpu.pipeline_mode<synchronous>, transform_indices = @transform_2, window_bounds = array<i64: 1, 3>}, {pipeline_mode = #tpu.pipeline_mode<synchronous>, transform_indices = @transform_3, window_bounds = array<i64: 3, 8, 392>}, {transform_indices = @transform_4, window_bounds = array<i64: 1, 8, 384>}]} {
    %c0 = arith.constant 0 : index
    %c0_0 = arith.constant 0 : index
    %c0_1 = arith.constant 0 : index
    %0 = vector.load %arg1[%c0, %c0_0, %c0_1] : memref<1x8x640xf32, #tpu.memory_space<vmem>>, vector<1x8x640xf32>
    %1 = vector.shape_cast %0 : vector<1x8x640xf32> to vector<8x640xf32>
    %cst = arith.constant dense<0.000000e+00> : vector<8xf32>
    %2 = vector.multi_reduction <add>, %1, %cst [1] : vector<8x640xf32> to vector<8xf32>
    %3 = vector.shape_cast %2 : vector<8xf32> to vector<8x1xf32>
    %c0_2 = arith.constant 0 : index
    %c0_3 = arith.constant 0 : index
    %4 = vector.load %arg2[%c0_2, %c0_3] : memref<8x3xf32, #tpu.memory_space<vmem>>, vector<8x3xf32>
    %5 = vector.broadcast %3 : vector<8x1xf32> to vector<8x3xf32>
    %6 = arith.mulf %5, %4 : vector<8x3xf32>
    %cst_4 = arith.constant dense<0.000000e+00> : vector<3xf32>
    %7 = vector.multi_reduction <add>, %6, %cst_4 [0] : vector<8x3xf32> to vector<3xf32>
    %8 = vector.shape_cast %7 : vector<3xf32> to vector<1x3xf32>
    %cst_5 = arith.constant 3.906250e-03 : f32
    %9 = vector.broadcast %cst_5 : f32 to vector<1x3xf32>
    %10 = arith.mulf %8, %9 : vector<1x3xf32>
    %c0_6 = arith.constant 0 : index
    %c0_7 = arith.constant 0 : index
    %11 = vector.load %arg3[%c0_6, %c0_7] : memref<1x3xf32, #tpu.memory_space<vmem>>, vector<1x3xf32>
    %12 = arith.addf %10, %11 : vector<1x3xf32>
    %13 = arith.negf %12 : vector<1x3xf32>
    %14 = math.exp %13 : vector<1x3xf32>
    %cst_8 = arith.constant 1.000000e+00 : f32
    %15 = vector.broadcast %cst_8 : f32 to vector<1x3xf32>
    %16 = arith.addf %15, %14 : vector<1x3xf32>
    %17 = arith.divf %15, %16 : vector<1x3xf32>
    %18 = vector.extract_strided_slice %17 {offsets = [0, 0], sizes = [1, 1], strides = [1, 1]} : vector<1x3xf32> to vector<1x1xf32>
    %c0_9 = arith.constant 0 : index
    %c0_10 = arith.constant 0 : index
    %c0_11 = arith.constant 0 : index
    %19 = vector.load %arg4[%c0_9, %c0_10, %c0_11] : memref<3x8x392xf32, #tpu.memory_space<vmem>>, vector<1x8x392xf32>
    %20 = vector.shape_cast %19 : vector<1x8x392xf32> to vector<8x392xf32>
    %21 = vector.broadcast %18 : vector<1x1xf32> to vector<8x392xf32>
    %22 = arith.mulf %21, %20 : vector<8x392xf32>
    %23 = vector.extract_strided_slice %17 {offsets = [0, 1], sizes = [1, 1], strides = [1, 1]} : vector<1x3xf32> to vector<1x1xf32>
    %c1 = arith.constant 1 : index
    %c0_12 = arith.constant 0 : index
    %c0_13 = arith.constant 0 : index
    %24 = vector.load %arg4[%c1, %c0_12, %c0_13] : memref<3x8x392xf32, #tpu.memory_space<vmem>>, vector<1x8x392xf32>
    %25 = vector.shape_cast %24 : vector<1x8x392xf32> to vector<8x392xf32>
    %26 = vector.broadcast %23 : vector<1x1xf32> to vector<8x392xf32>
    %27 = arith.mulf %26, %25 : vector<8x392xf32>
    %28 = arith.addf %22, %27 : vector<8x392xf32>
    %29 = vector.extract_strided_slice %17 {offsets = [0, 2], sizes = [1, 1], strides = [1, 1]} : vector<1x3xf32> to vector<1x1xf32>
    %c2 = arith.constant 2 : index
    %c0_14 = arith.constant 0 : index
    %c0_15 = arith.constant 0 : index
    %30 = vector.load %arg4[%c2, %c0_14, %c0_15] : memref<3x8x392xf32, #tpu.memory_space<vmem>>, vector<1x8x392xf32>
    %31 = vector.shape_cast %30 : vector<1x8x392xf32> to vector<8x392xf32>
    %32 = vector.broadcast %29 : vector<1x1xf32> to vector<8x392xf32>
    %33 = arith.mulf %32, %31 : vector<8x392xf32>
    %34 = arith.addf %28, %33 : vector<8x392xf32>
    %cst_16 = arith.constant 0.000000e+00 : f32
    %35 = vector.broadcast %cst_16 : f32 to vector<8x384xf32>
    %36 = vector.extract_strided_slice %1 {offsets = [0, 0], sizes = [8, 384], strides = [1, 1]} : vector<8x640xf32> to vector<8x384xf32>
    %37 = vector.extract_strided_slice %1 {offsets = [0, 1], sizes = [8, 384], strides = [1, 1]} : vector<8x640xf32> to vector<8x384xf32>
    %38 = vector.extract_strided_slice %1 {offsets = [0, 2], sizes = [8, 384], strides = [1, 1]} : vector<8x640xf32> to vector<8x384xf32>
    %39 = vector.extract_strided_slice %1 {offsets = [0, 3], sizes = [8, 384], strides = [1, 1]} : vector<8x640xf32> to vector<8x384xf32>
    %40 = vector.extract_strided_slice %1 {offsets = [0, 4], sizes = [8, 384], strides = [1, 1]} : vector<8x640xf32> to vector<8x384xf32>
    %41 = vector.extract_strided_slice %1 {offsets = [0, 5], sizes = [8, 384], strides = [1, 1]} : vector<8x640xf32> to vector<8x384xf32>
    %42 = vector.extract_strided_slice %1 {offsets = [0, 6], sizes = [8, 384], strides = [1, 1]} : vector<8x640xf32> to vector<8x384xf32>
    %43 = tpu.concatenate %36, %37, %38, %39, %40, %41, %42 in 0 : vector<8x384xf32>, vector<8x384xf32>, vector<8x384xf32>, vector<8x384xf32>, vector<8x384xf32>, vector<8x384xf32>, vector<8x384xf32> -> vector<56x384xf32>
    %44 = vector.extract_strided_slice %34 {offsets = [0, 0], sizes = [8, 56], strides = [1, 1]} : vector<8x392xf32> to vector<8x56xf32>
    %cst_17 = arith.constant dense<0.000000e+00> : vector<8x384xf32>
    %45 = tpu.matmul %44, %43, %cst_17 {dimension_numbers = #tpu.dot_dimension_numbers<[1], [0], [0], [1], [0, 0, 1, 1], [], []>} : vector<8x56xf32>, vector<56x384xf32>, vector<8x384xf32> -> vector<8x384xf32>
    %46 = arith.addf %35, %45 : vector<8x384xf32>
    %47 = vector.extract_strided_slice %1 {offsets = [0, 22], sizes = [8, 384], strides = [1, 1]} : vector<8x640xf32> to vector<8x384xf32>
    %48 = vector.extract_strided_slice %1 {offsets = [0, 23], sizes = [8, 384], strides = [1, 1]} : vector<8x640xf32> to vector<8x384xf32>
    %49 = vector.extract_strided_slice %1 {offsets = [0, 24], sizes = [8, 384], strides = [1, 1]} : vector<8x640xf32> to vector<8x384xf32>
    %50 = vector.extract_strided_slice %1 {offsets = [0, 25], sizes = [8, 384], strides = [1, 1]} : vector<8x640xf32> to vector<8x384xf32>
    %51 = vector.extract_strided_slice %1 {offsets = [0, 26], sizes = [8, 384], strides = [1, 1]} : vector<8x640xf32> to vector<8x384xf32>
    %52 = vector.extract_strided_slice %1 {offsets = [0, 27], sizes = [8, 384], strides = [1, 1]} : vector<8x640xf32> to vector<8x384xf32>
    %53 = vector.extract_strided_slice %1 {offsets = [0, 28], sizes = [8, 384], strides = [1, 1]} : vector<8x640xf32> to vector<8x384xf32>
    %54 = tpu.concatenate %47, %48, %49, %50, %51, %52, %53 in 0 : vector<8x384xf32>, vector<8x384xf32>, vector<8x384xf32>, vector<8x384xf32>, vector<8x384xf32>, vector<8x384xf32>, vector<8x384xf32> -> vector<56x384xf32>
    %55 = vector.extract_strided_slice %34 {offsets = [0, 56], sizes = [8, 56], strides = [1, 1]} : vector<8x392xf32> to vector<8x56xf32>
    %cst_18 = arith.constant dense<0.000000e+00> : vector<8x384xf32>
    %56 = tpu.matmul %55, %54, %cst_18 {dimension_numbers = #tpu.dot_dimension_numbers<[1], [0], [0], [1], [0, 0, 1, 1], [], []>} : vector<8x56xf32>, vector<56x384xf32>, vector<8x384xf32> -> vector<8x384xf32>
    %57 = arith.addf %46, %56 : vector<8x384xf32>
    %58 = vector.extract_strided_slice %1 {offsets = [0, 44], sizes = [8, 384], strides = [1, 1]} : vector<8x640xf32> to vector<8x384xf32>
    %59 = vector.extract_strided_slice %1 {offsets = [0, 45], sizes = [8, 384], strides = [1, 1]} : vector<8x640xf32> to vector<8x384xf32>
    %60 = vector.extract_strided_slice %1 {offsets = [0, 46], sizes = [8, 384], strides = [1, 1]} : vector<8x640xf32> to vector<8x384xf32>
    %61 = vector.extract_strided_slice %1 {offsets = [0, 47], sizes = [8, 384], strides = [1, 1]} : vector<8x640xf32> to vector<8x384xf32>
    %62 = vector.extract_strided_slice %1 {offsets = [0, 48], sizes = [8, 384], strides = [1, 1]} : vector<8x640xf32> to vector<8x384xf32>
    %63 = vector.extract_strided_slice %1 {offsets = [0, 49], sizes = [8, 384], strides = [1, 1]} : vector<8x640xf32> to vector<8x384xf32>
    %64 = vector.extract_strided_slice %1 {offsets = [0, 50], sizes = [8, 384], strides = [1, 1]} : vector<8x640xf32> to vector<8x384xf32>
    %65 = tpu.concatenate %58, %59, %60, %61, %62, %63, %64 in 0 : vector<8x384xf32>, vector<8x384xf32>, vector<8x384xf32>, vector<8x384xf32>, vector<8x384xf32>, vector<8x384xf32>, vector<8x384xf32> -> vector<56x384xf32>
    %66 = vector.extract_strided_slice %34 {offsets = [0, 112], sizes = [8, 56], strides = [1, 1]} : vector<8x392xf32> to vector<8x56xf32>
    %cst_19 = arith.constant dense<0.000000e+00> : vector<8x384xf32>
    %67 = tpu.matmul %66, %65, %cst_19 {dimension_numbers = #tpu.dot_dimension_numbers<[1], [0], [0], [1], [0, 0, 1, 1], [], []>} : vector<8x56xf32>, vector<56x384xf32>, vector<8x384xf32> -> vector<8x384xf32>
    %68 = arith.addf %57, %67 : vector<8x384xf32>
    %69 = vector.extract_strided_slice %1 {offsets = [0, 66], sizes = [8, 384], strides = [1, 1]} : vector<8x640xf32> to vector<8x384xf32>
    %70 = vector.extract_strided_slice %1 {offsets = [0, 67], sizes = [8, 384], strides = [1, 1]} : vector<8x640xf32> to vector<8x384xf32>
    %71 = vector.extract_strided_slice %1 {offsets = [0, 68], sizes = [8, 384], strides = [1, 1]} : vector<8x640xf32> to vector<8x384xf32>
    %72 = vector.extract_strided_slice %1 {offsets = [0, 69], sizes = [8, 384], strides = [1, 1]} : vector<8x640xf32> to vector<8x384xf32>
    %73 = vector.extract_strided_slice %1 {offsets = [0, 70], sizes = [8, 384], strides = [1, 1]} : vector<8x640xf32> to vector<8x384xf32>
    %74 = vector.extract_strided_slice %1 {offsets = [0, 71], sizes = [8, 384], strides = [1, 1]} : vector<8x640xf32> to vector<8x384xf32>
    %75 = vector.extract_strided_slice %1 {offsets = [0, 72], sizes = [8, 384], strides = [1, 1]} : vector<8x640xf32> to vector<8x384xf32>
    %76 = tpu.concatenate %69, %70, %71, %72, %73, %74, %75 in 0 : vector<8x384xf32>, vector<8x384xf32>, vector<8x384xf32>, vector<8x384xf32>, vector<8x384xf32>, vector<8x384xf32>, vector<8x384xf32> -> vector<56x384xf32>
    %77 = vector.extract_strided_slice %34 {offsets = [0, 168], sizes = [8, 56], strides = [1, 1]} : vector<8x392xf32> to vector<8x56xf32>
    %cst_20 = arith.constant dense<0.000000e+00> : vector<8x384xf32>
    %78 = tpu.matmul %77, %76, %cst_20 {dimension_numbers = #tpu.dot_dimension_numbers<[1], [0], [0], [1], [0, 0, 1, 1], [], []>} : vector<8x56xf32>, vector<56x384xf32>, vector<8x384xf32> -> vector<8x384xf32>
    %79 = arith.addf %68, %78 : vector<8x384xf32>
    %80 = vector.extract_strided_slice %1 {offsets = [0, 88], sizes = [8, 384], strides = [1, 1]} : vector<8x640xf32> to vector<8x384xf32>
    %81 = vector.extract_strided_slice %1 {offsets = [0, 89], sizes = [8, 384], strides = [1, 1]} : vector<8x640xf32> to vector<8x384xf32>
    %82 = vector.extract_strided_slice %1 {offsets = [0, 90], sizes = [8, 384], strides = [1, 1]} : vector<8x640xf32> to vector<8x384xf32>
    %83 = vector.extract_strided_slice %1 {offsets = [0, 91], sizes = [8, 384], strides = [1, 1]} : vector<8x640xf32> to vector<8x384xf32>
    %84 = vector.extract_strided_slice %1 {offsets = [0, 92], sizes = [8, 384], strides = [1, 1]} : vector<8x640xf32> to vector<8x384xf32>
    %85 = vector.extract_strided_slice %1 {offsets = [0, 93], sizes = [8, 384], strides = [1, 1]} : vector<8x640xf32> to vector<8x384xf32>
    %86 = vector.extract_strided_slice %1 {offsets = [0, 94], sizes = [8, 384], strides = [1, 1]} : vector<8x640xf32> to vector<8x384xf32>
    %87 = tpu.concatenate %80, %81, %82, %83, %84, %85, %86 in 0 : vector<8x384xf32>, vector<8x384xf32>, vector<8x384xf32>, vector<8x384xf32>, vector<8x384xf32>, vector<8x384xf32>, vector<8x384xf32> -> vector<56x384xf32>
    %88 = vector.extract_strided_slice %34 {offsets = [0, 224], sizes = [8, 56], strides = [1, 1]} : vector<8x392xf32> to vector<8x56xf32>
    %cst_21 = arith.constant dense<0.000000e+00> : vector<8x384xf32>
    %89 = tpu.matmul %88, %87, %cst_21 {dimension_numbers = #tpu.dot_dimension_numbers<[1], [0], [0], [1], [0, 0, 1, 1], [], []>} : vector<8x56xf32>, vector<56x384xf32>, vector<8x384xf32> -> vector<8x384xf32>
    %90 = arith.addf %79, %89 : vector<8x384xf32>
    %91 = vector.extract_strided_slice %1 {offsets = [0, 110], sizes = [8, 384], strides = [1, 1]} : vector<8x640xf32> to vector<8x384xf32>
    %92 = vector.extract_strided_slice %1 {offsets = [0, 111], sizes = [8, 384], strides = [1, 1]} : vector<8x640xf32> to vector<8x384xf32>
    %93 = vector.extract_strided_slice %1 {offsets = [0, 112], sizes = [8, 384], strides = [1, 1]} : vector<8x640xf32> to vector<8x384xf32>
    %94 = vector.extract_strided_slice %1 {offsets = [0, 113], sizes = [8, 384], strides = [1, 1]} : vector<8x640xf32> to vector<8x384xf32>
    %95 = vector.extract_strided_slice %1 {offsets = [0, 114], sizes = [8, 384], strides = [1, 1]} : vector<8x640xf32> to vector<8x384xf32>
    %96 = vector.extract_strided_slice %1 {offsets = [0, 115], sizes = [8, 384], strides = [1, 1]} : vector<8x640xf32> to vector<8x384xf32>
    %97 = vector.extract_strided_slice %1 {offsets = [0, 116], sizes = [8, 384], strides = [1, 1]} : vector<8x640xf32> to vector<8x384xf32>
    %98 = tpu.concatenate %91, %92, %93, %94, %95, %96, %97 in 0 : vector<8x384xf32>, vector<8x384xf32>, vector<8x384xf32>, vector<8x384xf32>, vector<8x384xf32>, vector<8x384xf32>, vector<8x384xf32> -> vector<56x384xf32>
    %99 = vector.extract_strided_slice %34 {offsets = [0, 280], sizes = [8, 56], strides = [1, 1]} : vector<8x392xf32> to vector<8x56xf32>
    %cst_22 = arith.constant dense<0.000000e+00> : vector<8x384xf32>
    %100 = tpu.matmul %99, %98, %cst_22 {dimension_numbers = #tpu.dot_dimension_numbers<[1], [0], [0], [1], [0, 0, 1, 1], [], []>} : vector<8x56xf32>, vector<56x384xf32>, vector<8x384xf32> -> vector<8x384xf32>
    %101 = arith.addf %90, %100 : vector<8x384xf32>
    %102 = vector.extract_strided_slice %1 {offsets = [0, 132], sizes = [8, 384], strides = [1, 1]} : vector<8x640xf32> to vector<8x384xf32>
    %103 = vector.extract_strided_slice %1 {offsets = [0, 133], sizes = [8, 384], strides = [1, 1]} : vector<8x640xf32> to vector<8x384xf32>
    %104 = vector.extract_strided_slice %1 {offsets = [0, 134], sizes = [8, 384], strides = [1, 1]} : vector<8x640xf32> to vector<8x384xf32>
    %105 = vector.extract_strided_slice %1 {offsets = [0, 135], sizes = [8, 384], strides = [1, 1]} : vector<8x640xf32> to vector<8x384xf32>
    %106 = vector.extract_strided_slice %1 {offsets = [0, 136], sizes = [8, 384], strides = [1, 1]} : vector<8x640xf32> to vector<8x384xf32>
    %107 = vector.extract_strided_slice %1 {offsets = [0, 137], sizes = [8, 384], strides = [1, 1]} : vector<8x640xf32> to vector<8x384xf32>
    %108 = vector.extract_strided_slice %1 {offsets = [0, 138], sizes = [8, 384], strides = [1, 1]} : vector<8x640xf32> to vector<8x384xf32>
    %109 = tpu.concatenate %102, %103, %104, %105, %106, %107, %108 in 0 : vector<8x384xf32>, vector<8x384xf32>, vector<8x384xf32>, vector<8x384xf32>, vector<8x384xf32>, vector<8x384xf32>, vector<8x384xf32> -> vector<56x384xf32>
    %110 = vector.extract_strided_slice %34 {offsets = [0, 336], sizes = [8, 56], strides = [1, 1]} : vector<8x392xf32> to vector<8x56xf32>
    %cst_23 = arith.constant dense<0.000000e+00> : vector<8x384xf32>
    %111 = tpu.matmul %110, %109, %cst_23 {dimension_numbers = #tpu.dot_dimension_numbers<[1], [0], [0], [1], [0, 0, 1, 1], [], []>} : vector<8x56xf32>, vector<56x384xf32>, vector<8x384xf32> -> vector<8x384xf32>
    %112 = arith.addf %101, %111 : vector<8x384xf32>
    %c0_24 = arith.constant 0 : index
    %c0_25 = arith.constant 0 : index
    %c0_26 = arith.constant 0 : index
    %113 = vector.load %arg5[%c0_24, %c0_25, %c0_26] : memref<1x8x384xf32, #tpu.memory_space<vmem>>, vector<1x8x384xf32>
    %114 = vector.shape_cast %113 : vector<1x8x384xf32> to vector<8x384xf32>
    %115 = vector.shape_cast %112 : vector<8x384xf32> to vector<1x8x384xf32>
    tpu.vector_store %arg5[%c0_24, %c0_25, %c0_26], %115 {strides = array<i32>} : memref<1x8x384xf32, #tpu.memory_space<vmem>>, vector<1x8x384xf32>,
    return
  }
  func.func @transform_0(%arg0: i32) -> (i32, i32, i32) {
    %c0_i32 = arith.constant 0 : i32
    %c0_i32_0 = arith.constant 0 : i32
    %c0_i32_1 = arith.constant 0 : i32
    return %arg0, %c0_i32, %c0_i32_0 : i32, i32, i32
  }
  func.func @transform_1(%arg0: i32) -> (i32, i32) {
    %c0_i32 = arith.constant 0 : i32
    %c0_i32_0 = arith.constant 0 : i32
    %c0_i32_1 = arith.constant 0 : i32
    return %c0_i32, %c0_i32_0 : i32, i32
  }
  func.func @transform_2(%arg0: i32) -> (i32, i32) {
    %c0_i32 = arith.constant 0 : i32
    %c0_i32_0 = arith.constant 0 : i32
    %c0_i32_1 = arith.constant 0 : i32
    return %c0_i32, %c0_i32_0 : i32, i32
  }
  func.func @transform_3(%arg0: i32) -> (i32, i32, i32) {
    %c0_i32 = arith.constant 0 : i32
    %c0_i32_0 = arith.constant 0 : i32
    %c0_i32_1 = arith.constant 0 : i32
    %c0_i32_2 = arith.constant 0 : i32
    return %c0_i32, %c0_i32_0, %c0_i32_1 : i32, i32, i32
  }
  func.func @transform_4(%arg0: i32) -> (i32, i32, i32) {
    %c0_i32 = arith.constant 0 : i32
    %c0_i32_0 = arith.constant 0 : i32
    %c0_i32_1 = arith.constant 0 : i32
    return %arg0, %c0_i32, %c0_i32_0 : i32, i32, i32
  }
}

</mosaic_0001>

<llo_original>
// kernel: tpu_custom_call.1
$region0: #{tpu_custom_call.1}
  #allocation0 [shape = 'u32[]', space=smem, size = 0x4, offset = 0x4, fixed_abs, tag = 'smem constant byte address 0x4 - core index']
  #allocation1 [shape = 'u32[72,128]{1,0:T(1,128)}', space=vmem, size = 0x9000, scoped, tag = 'internal scratch']
  %s0 = inlined_call_operand.hbm [shape: f32[2,8,640], index: 0, kind: input, shape index: {}]
  %s1 = inlined_call_operand.vmem [shape: f32[8,3], index: 1, kind: input, shape index: {}]
  %s2 = inlined_call_operand.vmem [shape: f32[1,3], index: 2, kind: input, shape index: {}]
  %s3 = inlined_call_operand.hbm [shape: f32[3,8,392], index: 3, kind: input, shape index: {}]
  %s4 = inlined_call_operand.hbm [shape: f32[2,8,384], index: 4, kind: output, shape index: {}]
  %s5 = sld [smem:[#allocation0]]
  $region57: #{tpu_custom_call.1} parent=0
    _
  %s7 = ssub.s32 1, %s5
  %s8 = scalar_select 0, %s7, %s5
  $region1: #{tpu_custom_call.1} parent=0
    #allocation2 [shape = 'u8[40960]{0}', space=vmem, size = 0xa000, scoped, tag = 'input window, operand 0']
    #allocation3 [shape = 's32[2]{0}', space=sflag, size = 0x8, scoped, tag = 'scoped memory for tpu_custom_call.1']
    #allocation4 [shape = 's32[2]{0}', space=sflag, size = 0x8, scoped, tag = 'scoped memory for tpu_custom_call.1']
    #allocation5 [shape = 'u8[49152]{0}', space=vmem, size = 0xc000, scoped, tag = 'input window, operand 3, single buffered']
    #allocation6 [shape = 's32[1]{0}', space=sflag, size = 0x4, scoped, tag = 'scoped memory for tpu_custom_call.1']
    #allocation7 [shape = 'u8[24576]{0}', space=vmem, size = 0x6000, scoped, tag = 'output window, operand 0']
    %9 = vsyncpa [#allocation3], 0
    %s10 = scalar_lea.sflag [#allocation3], 1
    %11 = vsyncpa %s10, 0
    %12 = vsyncpa [#allocation6], 0
    %13 = vsyncpa [#allocation4], 0
    %s14 = scalar_lea.sflag [#allocation4], 1
    %15 = vsyncpa %s14, 0
    loop: start=0, step=1, limit=4
    $region2: #{tpu_custom_call.1} parent=1 // loop_pre_header
      _
    $region3: #{tpu_custom_call.1} parent=1 // loop_header
      %s17 = sphi 0, %s21
      %p18 = scmp.ge.s32.totalorder %s17, 4
      %s27 = sphi 0, %s29
      %s30 = sphi 0, %s27
      %s31 = sphi 0, %s30
      %s47 = sphi 0, %s31
      %s51 = sphi 0, %s51
      %s53 = sphi 0, %s51
      %s54 = sphi 0, %s53
      %s68 = sphi 0, %s54
      %s72 = sphi 0, %s72
      %s74 = sphi 0, %s72
      %s75 = sphi 0, %s74
      %s89 = sphi 0, %s75
      %s93 = sphi 0, %s93
      %s95 = sphi 0, %s93
      %s96 = sphi 0, %s95
      %s110 = sphi 0, %s96
      %s116 = sphi 0, %s118
      %s119 = sphi 0, %s116
      %s120 = sphi 0, %s119
      %s136 = sphi 0, %s120
    $region4: #{tpu_custom_call.1} parent=1 // loop_header_branch
      %20 = sbr.rel (%p18) target = $region8
    $region5: #{tpu_custom_call.1} parent=1 // loop_body
      %s22 = ssub.s32 %s17, 1
      %s23 = ssub.s32 %s17, 2
      %s24 = sadd.s32 %s17, 1
      %s25 = ssub.s32 %s17, %s24
      %p26 = scmp.eq.s32.totalorder %s25, 0
      %s28 = sadd.s32 %s27, 1
      %s29 = scalar_select %p26, %s27, %s28
      %p32 = pneg %p26
      %p33 = scmp.eq.s32.totalorder %s17, 1
      %p34 = por %p32, %p33
      %p35 = scmp.ne.s32.totalorder %s27, %s30
      %p36 = scmp.eq.s32.totalorder %s17, 0
      %p37 = por %p35, %p36
      %p38 = scmp.ne.s32.totalorder %s27, %s30
      %p39 = scmp.eq.s32.totalorder %s22, 1
      %p40 = por %p38, %p39
      %p41 = scmp.ne.s32.totalorder %s30, %s31
      %p42 = scmp.eq.s32.totalorder %s22, 0
      %p43 = por %p41, %p42
      %p44 = scmp.ne.s32.totalorder %s30, %s31
      %p45 = scmp.eq.s32.totalorder %s23, 1
      %p46 = por %p44, %p45
      %p48 = scmp.ne.s32.totalorder %s31, %s47
      %p49 = scmp.eq.s32.totalorder %s23, 0
      %p50 = por %p48, %p49
      %s52 = sadd.s32 %s51, 1
      %p55 = scmp.eq.s32.totalorder %s17, 1
      %p56 = scmp.ne.s32.totalorder %s51, %s53
      %p57 = scmp.eq.s32.totalorder %s17, 0
      %p58 = por %p56, %p57
      %p59 = scmp.ne.s32.totalorder %s51, %s53
      %p60 = scmp.eq.s32.totalorder %s22, 1
      %p61 = por %p59, %p60
      %p62 = scmp.ne.s32.totalorder %s53, %s54
      %p63 = scmp.eq.s32.totalorder %s22, 0
      %p64 = por %p62, %p63
      %p65 = scmp.ne.s32.totalorder %s53, %s54
      %p66 = scmp.eq.s32.totalorder %s23, 1
      %p67 = por %p65, %p66
      %p69 = scmp.ne.s32.totalorder %s54, %s68
      %p70 = scmp.eq.s32.totalorder %s23, 0
      %p71 = por %p69, %p70
      %s73 = sadd.s32 %s72, 1
      %p76 = scmp.eq.s32.totalorder %s17, 1
      %p77 = scmp.ne.s32.totalorder %s72, %s74
      %p78 = scmp.eq.s32.totalorder %s17, 0
      %p79 = por %p77, %p78
      %p80 = scmp.ne.s32.totalorder %s72, %s74
      %p81 = scmp.eq.s32.totalorder %s22, 1
      %p82 = por %p80, %p81
      %p83 = scmp.ne.s32.totalorder %s74, %s75
      %p84 = scmp.eq.s32.totalorder %s22, 0
      %p85 = por %p83, %p84
      %p86 = scmp.ne.s32.totalorder %s74, %s75
      %p87 = scmp.eq.s32.totalorder %s23, 1
      %p88 = por %p86, %p87
      %p90 = scmp.ne.s32.totalorder %s75, %s89
      %p91 = scmp.eq.s32.totalorder %s23, 0
      %p92 = por %p90, %p91
      %s94 = sadd.s32 %s93, 1
      %p97 = scmp.eq.s32.totalorder %s17, 1
      %p98 = scmp.ne.s32.totalorder %s93, %s95
      %p99 = scmp.eq.s32.totalorder %s17, 0
      %p100 = por %p98, %p99
      %p101 = scmp.ne.s32.totalorder %s93, %s95
      %p102 = scmp.eq.s32.totalorder %s22, 1
      %p103 = por %p101, %p102
      %p104 = scmp.ne.s32.totalorder %s95, %s96
      %p105 = scmp.eq.s32.totalorder %s22, 0
      %p106 = por %p104, %p105
      %p107 = scmp.ne.s32.totalorder %s95, %s96
      %p108 = scmp.eq.s32.totalorder %s23, 1
      %p109 = por %p107, %p108
      %p111 = scmp.ne.s32.totalorder %s96, %s110
      %p112 = scmp.eq.s32.totalorder %s23, 0
      %p113 = por %p111, %p112
      %s114 = ssub.s32 %s17, %s24
      %p115 = scmp.eq.s32.totalorder %s114, 0
      %s117 = sadd.s32 %s116, 1
      %s118 = scalar_select %p115, %s116, %s117
      %p121 = pneg %p115
      %p122 = scmp.eq.s32.totalorder %s17, 1
      %p123 = por %p121, %p122
      %p124 = scmp.ne.s32.totalorder %s116, %s119
      %p125 = scmp.eq.s32.totalorder %s17, 0
      %p126 = por %p124, %p125
      %p127 = scmp.ne.s32.totalorder %s116, %s119
      %p128 = scmp.eq.s32.totalorder %s22, 1
      %p129 = por %p127, %p128
      %p130 = scmp.ne.s32.totalorder %s119, %s120
      %p131 = scmp.eq.s32.totalorder %s22, 0
      %p132 = por %p130, %p131
      %p133 = scmp.ne.s32.totalorder %s119, %s120
      %p134 = scmp.eq.s32.totalorder %s23, 1
      %p135 = por %p133, %p134
      %p137 = scmp.ne.s32.totalorder %s120, %s136
      %p138 = scmp.eq.s32.totalorder %s23, 0
      %p139 = por %p137, %p138
      %p140 = scmp.le.s32.totalorder 1, %s17
      %p141 = scmp.lt.s32.totalorder %s17, 3
      %p142 = pnand %p140, %p141
      %p143 = pneg %p142
      // Predicated region
      $region9: #{tpu_custom_call.1} parent=5 // pred_check
        _
      $region10: #{tpu_custom_call.1} parent=5 // pred_check_branch
        %145 = sbr.rel (%p142) target = $region12
      $region11: #{tpu_custom_call.1} parent=5 // pred_region
        %s146 = ssub.s32 %s17, 1
        // Predicated region
        $region13: #{tpu_custom_call.1} parent=11 // pred_check
          %p147 = pneg %p64
        $region14: #{tpu_custom_call.1} parent=11 // pred_check_branch
          %149 = sbr.rel (%p147) target = $region16
        $region15: #{tpu_custom_call.1} parent=11 // pred_region
          _
        $region16: #{tpu_custom_call.1} parent=11 // pred_fallthru
          _
        // Predicated region
        $region17: #{tpu_custom_call.1} parent=11 // pred_check
          %p150 = pneg %p85
        $region18: #{tpu_custom_call.1} parent=11 // pred_check_branch
          %152 = sbr.rel (%p150) target = $region20
        $region19: #{tpu_custom_call.1} parent=11 // pred_region
          _
        $region20: #{tpu_custom_call.1} parent=11 // pred_fallthru
          _
        // Predicated region
        $region21: #{tpu_custom_call.1} parent=11 // pred_check
          %p153 = pneg %p106
        $region22: #{tpu_custom_call.1} parent=11 // pred_check_branch
          %155 = sbr.rel (%p153) target = $region24
        $region23: #{tpu_custom_call.1} parent=11 // pred_region
          %157 = vsyncadd [#allocation6], 0
          %s158 = sshll.u32 %s3, 4
          %s159 = int_to_ptr.hbm [resolvable:$true] %s158
          %s160 = sshll.u32 [#allocation5], 4
          %s161 = int_to_ptr.vmem [resolvable:$true] %s160
          %166 = dma.hbm_to_vmem [thread:$0]  %s159, 1536, %s161, [#allocation6], 512, 512, 32
        $region24: #{tpu_custom_call.1} parent=11 // pred_fallthru
          _
      $region12: #{tpu_custom_call.1} parent=5 // pred_fallthru
        _
      %p167 = scmp.lt.s32.totalorder %s17, 2
      // Predicated region
      $region25: #{tpu_custom_call.1} parent=5 // pred_check
        %p168 = pneg %p167
      $region26: #{tpu_custom_call.1} parent=5 // pred_check_branch
        %170 = sbr.rel (%p168) target = $region28
      $region27: #{tpu_custom_call.1} parent=5 // pred_region
        // Predicated region
        $region29: #{tpu_custom_call.1} parent=27 // pred_check
          %p171 = pneg %p37
        $region30: #{tpu_custom_call.1} parent=27 // pred_check_branch
          %173 = sbr.rel (%p171) target = $region32
        $region31: #{tpu_custom_call.1} parent=27 // pred_region
          %s174 = sand.u32 %s27, 1
          %s175 = scalar_lea.sflag [#allocation3], %s174
          %s176 = sand.u32 %s27, 1
          %s177 = smul.addr %s176, 40
          %s178 = scalar_lea.vmem [#allocation2], %s177
          %180 = vsyncadd %s175, 0
          %s181 = smul.addr %s17, 5
          %s182 = smul.addr %s181, 8
          %s183 = scalar_lea.hbm %s0, %s182
          %s185 = sshll.u32 %s183, 4
          %s186 = int_to_ptr.hbm [resolvable:$true] %s185
          %s187 = sshll.u32 %s178, 4
          %s188 = int_to_ptr.vmem [resolvable:$true] %s187
          %190 = dma.hbm_to_vmem [thread:$0]  %s186, 640, %s188, %s175
        $region32: #{tpu_custom_call.1} parent=27 // pred_fallthru
          _
      $region28: #{tpu_custom_call.1} parent=5 // pred_fallthru
        _
      %p191 = scmp.le.s32.totalorder 1, %s17
      %p192 = scmp.lt.s32.totalorder %s17, 3
      %p193 = pnand %p191, %p192
      %p194 = pneg %p193
      // Predicated region
      $region33: #{tpu_custom_call.1} parent=5 // pred_check
        _
      $region34: #{tpu_custom_call.1} parent=5 // pred_check_branch
        %196 = sbr.rel (%p193) target = $region36
      $region35: #{tpu_custom_call.1} parent=5 // pred_region
        %s197 = ssub.s32 %s17, 1
        %s198 = sand.u32 %s30, 1
        %s199 = scalar_lea.sflag [#allocation3], %s198
        %s200 = sand.u32 %s30, 1
        %s201 = smul.addr %s200, 40
        %s202 = scalar_lea.vmem [#allocation2], %s201
        // Predicated region
        $region37: #{tpu_custom_call.1} parent=35 // pred_check
          %p203 = pneg %p43
        $region38: #{tpu_custom_call.1} parent=35 // pred_check_branch
          %205 = sbr.rel (%p203) target = $region40
        $region39: #{tpu_custom_call.1} parent=35 // pred_region
          %207 = dma.done %s199, 640
        $region40: #{tpu_custom_call.1} parent=35 // pred_fallthru
          _
        // Predicated region
        $region41: #{tpu_custom_call.1} parent=35 // pred_check
          %p208 = pneg %p106
        $region42: #{tpu_custom_call.1} parent=35 // pred_check_branch
          %210 = sbr.rel (%p208) target = $region44
        $region43: #{tpu_custom_call.1} parent=35 // pred_region
          %212 = dma.done [#allocation6], 1536
        $region44: #{tpu_custom_call.1} parent=35 // pred_fallthru
          _
        %s213 = sand.u32 %s30, 1
        %s214 = scalar_lea.sflag [#allocation3], %s213
        %s215 = sand.u32 %s30, 1
        %s216 = smul.addr %s215, 40
        %s217 = scalar_lea.vmem [#allocation2], %s216
        %p218 = pneg %p43
        %p219 = pneg %p40
        %p220 = pneg %p64
        %p221 = pneg %p61
        %p222 = pneg %p85
        %p223 = pneg %p82
        %p224 = pneg %p106
        %p225 = pneg %p103
        %p226 = pneg %p132
        %p227 = pneg %p129
        %s228 = sand.u32 %s119, 1
        %s229 = scalar_lea.sflag [#allocation4], %s228
        %s230 = sand.u32 %s119, 1
        %s231 = smul.addr %s230, 24
        %s232 = scalar_lea.vmem [#allocation7], %s231
        %v233 = vld [vmem:[%s202] sm:$0xff]
        %v234 = vld [vmem:[%s202 + $0x8] sm:$0xff]
        %v235 = vld [vmem:[%s202 + $0x10] sm:$0xff]
        %v236 = vld [vmem:[%s202 + $0x18] sm:$0xff]
        %v237 = vld [vmem:[%s202 + $0x20] sm:$0xff]
        %v238 = vadd.f32 %v233, %v234
        %v239 = vadd.f32 %v238, %v235
        %v240 = vadd.f32 %v239, %v236
        %v241 = vadd.f32 %v240, %v237
        %242 = vadd.xlane.f32.xlu0 %v241
        %v243 = vpop.xlane.xlu0 %242
        %v244 = vld [vmem:[%s1] sm:$0xff]
        %v245 = vmul.f32 %v243, %v244
        %vm246 = vcmask 23552
        %v247 = vsel %vm246, %v245, 0.0
        %v248 = vrot.slane %v247, 4
        %v249 = vadd.f32 %v247, %v248
        %v250 = vrot.slane %v249, 2
        %v251 = vadd.f32 %v249, %v250
        %v252 = vrot.slane %v251, 1
        %v253 = vadd.f32 %v251, %v252
        %v254 = vmul.f32 %v253, 0.00390625
        %v255 = vld [vmem:[%s2] sm:$0x1]
        %v256 = vadd.f32 %v254, %v255
        %v257 = vxor.u32 %v256, 2147483648
        %v258 = vmul.f32 %v257, 1.442695
        %v259 = vpow.pop %v258
        %v260 = vadd.f32 %v259, 1.0
        %v261 = vrcp.pop %v260
        %v262 = vmul.f32 %v260, %v261
        %v263 = vsub.f32 1.0, %v262
        %v264 = vmul.f32 %v261, %v263
        %v265 = vadd.f32 %v261, %v264
        %vm266 = vweird.f32 %v260
        %vm267 = vweird.f32 %v261
        %vm268 = vmor %vm266, %vm267
        %v269 = vsel %vm268, %v261, %v265
        %v270 = vand.u32 2147483647, %v260
        %vm271 = vcmp.eq.f32.partialorder %v270, 8.507059e+37
        %v272 = vand.u32 %v260, 2147483648
        %v273 = vor.u32 1.1754944e-38, %v272
        %v274 = vsel %vm271, %v273, %v269
        %v275 = vmul.f32 1.0, %v274
        %v276 = vld [vmem:[#allocation5] sm:$0xff]
        %v277 = vld [vmem:[#allocation5 + $0x8] sm:$0xff]
        %v278 = vld [vmem:[#allocation5 + $0x10] sm:$0xff]
        %v279 = vld [vmem:[#allocation5 + $0x18] sm:$0xff]
        %s281 = vtos %v275
        %v282 = vstv %s281
        %v284 = vmul.f32 %v282, %v276
        %v285 = vmul.f32 %v282, %v277
        %v286 = vmul.f32 %v282, %v278
        %v287 = vmul.f32 %v282, %v279
        %s288 = scalar_lea.vmem [#allocation5], 32
        %v289 = vld [vmem:[%s288] sm:$0xff]
        %v290 = vld [vmem:[%s288 + $0x8] sm:$0xff]
        %v291 = vld [vmem:[%s288 + $0x10] sm:$0xff]
        %v292 = vld [vmem:[%s288 + $0x18] sm:$0xff]
        %293 = vrot.lane.b32.xlu0 %v275, 127
        %v294 = vpop.permute.xlu0 %293
        %s295 = vtos %v294
        %v296 = vstv %s295
        %v298 = vmul.f32 %v296, %v289
        %v299 = vmul.f32 %v296, %v290
        %v300 = vmul.f32 %v296, %v291
        %v301 = vmul.f32 %v296, %v292
        %v302 = vadd.f32 %v284, %v298
        %v303 = vadd.f32 %v285, %v299
        %v304 = vadd.f32 %v286, %v300
        %v305 = vadd.f32 %v287, %v301
        %s306 = scalar_lea.vmem [#allocation5], 64
        %v307 = vld [vmem:[%s306] sm:$0xff]
        %v308 = vld [vmem:[%s306 + $0x8] sm:$0xff]
        %v309 = vld [vmem:[%s306 + $0x10] sm:$0xff]
        %v310 = vld [vmem:[%s306 + $0x18] sm:$0xff]
        %311 = vrot.lane.b32.xlu0 %v275, 126
        %v312 = vpop.permute.xlu0 %311
        %s313 = vtos %v312
        %v314 = vstv %s313
        %v316 = vmul.f32 %v314, %v307
        %v317 = vmul.f32 %v314, %v308
        %v318 = vmul.f32 %v314, %v309
        %v319 = vmul.f32 %v314, %v310
        %v320 = vadd.f32 %v302, %v316
        %v321 = vadd.f32 %v303, %v317
        %v322 = vadd.f32 %v304, %v318
        %v323 = vadd.f32 %v305, %v319
        %328 = vrot.lane.b32.xlu0 %v233, 127
        %v329 = vpop.permute.xlu0 %328
        %330 = vrot.lane.b32.xlu0 %v234, 127
        %v331 = vpop.permute.xlu0 %330
        %332 = vrot.lane.b32.xlu0 %v235, 127
        %v333 = vpop.permute.xlu0 %332
        %334 = vrot.lane.b32.xlu0 %v236, 127
        %v335 = vpop.permute.xlu0 %334
        %vm336 = vcmask 1039360
        %v337 = vsel %vm336, %v329, %v331
        %v338 = vsel %vm336, %v331, %v333
        %v339 = vsel %vm336, %v333, %v335
        %343 = vrot.lane.b32.xlu0 %v233, 126
        %v344 = vpop.permute.xlu0 %343
        %345 = vrot.lane.b32.xlu0 %v234, 126
        %v346 = vpop.permute.xlu0 %345
        %347 = vrot.lane.b32.xlu0 %v235, 126
        %v348 = vpop.permute.xlu0 %347
        %349 = vrot.lane.b32.xlu0 %v236, 126
        %v350 = vpop.permute.xlu0 %349
        %vm351 = vcmask 1031168
        %v352 = vsel %vm351, %v344, %v346
        %v353 = vsel %vm351, %v346, %v348
        %v354 = vsel %vm351, %v348, %v350
        %358 = vrot.lane.b32.xlu0 %v233, 125
        %v359 = vpop.permute.xlu0 %358
        %360 = vrot.lane.b32.xlu0 %v234, 125
        %v361 = vpop.permute.xlu0 %360
        %362 = vrot.lane.b32.xlu0 %v235, 125
        %v363 = vpop.permute.xlu0 %362
        %364 = vrot.lane.b32.xlu0 %v236, 125
        %v365 = vpop.permute.xlu0 %364
        %vm366 = vcmask 1022976
        %v367 = vsel %vm366, %v359, %v361
        %v368 = vsel %vm366, %v361, %v363
        %v369 = vsel %vm366, %v363, %v365
        %373 = vrot.lane.b32.xlu0 %v233, 124
        %v374 = vpop.permute.xlu0 %373
        %375 = vrot.lane.b32.xlu0 %v234, 124
        %v376 = vpop.permute.xlu0 %375
        %377 = vrot.lane.b32.xlu0 %v235, 124
        %v378 = vpop.permute.xlu0 %377
        %379 = vrot.lane.b32.xlu0 %v236, 124
        %v380 = vpop.permute.xlu0 %379
        %vm381 = vcmask 1014784
        %v382 = vsel %vm381, %v374, %v376
        %v383 = vsel %vm381, %v376, %v378
        %v384 = vsel %vm381, %v378, %v380
        %388 = vrot.lane.b32.xlu0 %v233, 123
        %v389 = vpop.permute.xlu0 %388
        %390 = vrot.lane.b32.xlu0 %v234, 123
        %v391 = vpop.permute.xlu0 %390
        %392 = vrot.lane.b32.xlu0 %v235, 123
        %v393 = vpop.permute.xlu0 %392
        %394 = vrot.lane.b32.xlu0 %v236, 123
        %v395 = vpop.permute.xlu0 %394
        %vm396 = vcmask 1006592
        %v397 = vsel %vm396, %v389, %v391
        %v398 = vsel %vm396, %v391, %v393
        %v399 = vsel %vm396, %v393, %v395
        %403 = vrot.lane.b32.xlu0 %v233, 122
        %v404 = vpop.permute.xlu0 %403
        %405 = vrot.lane.b32.xlu0 %v234, 122
        %v406 = vpop.permute.xlu0 %405
        %407 = vrot.lane.b32.xlu0 %v235, 122
        %v408 = vpop.permute.xlu0 %407
        %409 = vrot.lane.b32.xlu0 %v236, 122
        %v410 = vpop.permute.xlu0 %409
        %vm411 = vcmask 998400
        %v412 = vsel %vm411, %v404, %v406
        %v413 = vsel %vm411, %v406, %v408
        %v414 = vsel %vm411, %v408, %v410
        %419 = vrot.lane.b32.xlu0 %v320, 72
        %v420 = vpop.permute.xlu0 %419
        %421 = vrot.lane.b32.xlu0 %v233, 106
        %v422 = vpop.permute.xlu0 %421
        %423 = vrot.lane.b32.xlu0 %v234, 106
        %v424 = vpop.permute.xlu0 %423
        %425 = vrot.lane.b32.xlu0 %v235, 106
        %v426 = vpop.permute.xlu0 %425
        %427 = vrot.lane.b32.xlu0 %v236, 106
        %v428 = vpop.permute.xlu0 %427
        %429 = vrot.lane.b32.xlu0 %v337, 106
        %v430 = vpop.permute.xlu0 %429
        %431 = vrot.lane.b32.xlu0 %v338, 106
        %v432 = vpop.permute.xlu0 %431
        %433 = vrot.lane.b32.xlu0 %v339, 106
        %v434 = vpop.permute.xlu0 %433
        %435 = vrot.lane.b32.xlu0 %v335, 106
        %v436 = vpop.permute.xlu0 %435
        %437 = vrot.lane.b32.xlu0 %v352, 106
        %v438 = vpop.permute.xlu0 %437
        %439 = vrot.lane.b32.xlu0 %v353, 106
        %v440 = vpop.permute.xlu0 %439
        %441 = vrot.lane.b32.xlu0 %v354, 106
        %v442 = vpop.permute.xlu0 %441
        %443 = vrot.lane.b32.xlu0 %v350, 106
        %v444 = vpop.permute.xlu0 %443
        %445 = vrot.lane.b32.xlu0 %v367, 106
        %v446 = vpop.permute.xlu0 %445
        %447 = vrot.lane.b32.xlu0 %v368, 106
        %v448 = vpop.permute.xlu0 %447
        %449 = vrot.lane.b32.xlu0 %v369, 106
        %v450 = vpop.permute.xlu0 %449
        %451 = vrot.lane.b32.xlu0 %v365, 106
        %v452 = vpop.permute.xlu0 %451
        %453 = vrot.lane.b32.xlu0 %v382, 106
        %v454 = vpop.permute.xlu0 %453
        %455 = vrot.lane.b32.xlu0 %v383, 106
        %v456 = vpop.permute.xlu0 %455
        %457 = vrot.lane.b32.xlu0 %v384, 106
        %v458 = vpop.permute.xlu0 %457
        %459 = vrot.lane.b32.xlu0 %v380, 106
        %v460 = vpop.permute.xlu0 %459
        %461 = vrot.lane.b32.xlu0 %v397, 106
        %v462 = vpop.permute.xlu0 %461
        %463 = vrot.lane.b32.xlu0 %v398, 106
        %v464 = vpop.permute.xlu0 %463
        %465 = vrot.lane.b32.xlu0 %v399, 106
        %v466 = vpop.permute.xlu0 %465
        %467 = vrot.lane.b32.xlu0 %v395, 106
        %v468 = vpop.permute.xlu0 %467
        %469 = vrot.lane.b32.xlu0 %v412, 106
        %v470 = vpop.permute.xlu0 %469
        %471 = vrot.lane.b32.xlu0 %v413, 106
        %v472 = vpop.permute.xlu0 %471
        %473 = vrot.lane.b32.xlu0 %v414, 106
        %v474 = vpop.permute.xlu0 %473
        %475 = vrot.lane.b32.xlu0 %v410, 106
        %v476 = vpop.permute.xlu0 %475
        %vm477 = vcmask 867328
        %v478 = vsel %vm477, %v422, %v424
        %v479 = vsel %vm477, %v424, %v426
        %v480 = vsel %vm477, %v426, %v428
        %v481 = vsel %vm477, %v430, %v432
        %v482 = vsel %vm477, %v432, %v434
        %v483 = vsel %vm477, %v434, %v436
        %v484 = vsel %vm477, %v438, %v440
        %v485 = vsel %vm477, %v440, %v442
        %v486 = vsel %vm477, %v442, %v444
        %v487 = vsel %vm477, %v446, %v448
        %v488 = vsel %vm477, %v448, %v450
        %v489 = vsel %vm477, %v450, %v452
        %v490 = vsel %vm477, %v454, %v456
        %v491 = vsel %vm477, %v456, %v458
        %v492 = vsel %vm477, %v458, %v460
        %v493 = vsel %vm477, %v462, %v464
        %v494 = vsel %vm477, %v464, %v466
        %v495 = vsel %vm477, %v466, %v468
        %v496 = vsel %vm477, %v470, %v472
        %v497 = vsel %vm477, %v472, %v474
        %v498 = vsel %vm477, %v474, %v476
        %vm520 = vcmask 457728
        %v521 = vsel %vm520, %v420, 0
        %523 = vmatpush.msra.mxu0 0.0
        %524 = vmatpush.msra.mxu0 0.0
        %525 = vmatpush.msra.mxu0 0.0
        %526 = vmatpush.msra.mxu0 0.0
        %527 = vmatpush.msra.mxu0 0.0
        %528 = vmatpush.msra.mxu0 0.0
        %529 = vmatpush.msra.mxu0 0.0
        %530 = vmatpush.msra.mxu0 0.0
        %531 = vmatpush.msra.mxu0 0.0
        %532 = vmatpush.msra.mxu0 %v496
        %533 = vmatpush.msra.mxu0 %v493
        %534 = vmatpush.msra.mxu0 %v490
        %535 = vmatpush.msra.mxu0 %v487
        %536 = vmatpush.msra.mxu0 %v484
        %537 = vmatpush.msra.mxu0 %v481
        %538 = vmatpush.msra.mxu0 %v478
        %539 = vmatmul.f32.gmra.mxu0 %v521
        %v540 = vpop.f32.mrf.mxu0
        %v541 = vadd.f32 0.0, %v540
        %542 = vdwg.mxu0
        %543 = vmatpush.msra.mxu0 0.0
        %544 = vmatpush.msra.mxu0 0.0
        %545 = vmatpush.msra.mxu0 0.0
        %546 = vmatpush.msra.mxu0 0.0
        %547 = vmatpush.msra.mxu0 0.0
        %548 = vmatpush.msra.mxu0 0.0
        %549 = vmatpush.msra.mxu0 0.0
        %550 = vmatpush.msra.mxu0 0.0
        %551 = vmatpush.msra.mxu0 0.0
        %552 = vmatpush.msra.mxu0 %v497
        %553 = vmatpush.msra.mxu0 %v494
        %554 = vmatpush.msra.mxu0 %v491
        %555 = vmatpush.msra.mxu0 %v488
        %556 = vmatpush.msra.mxu0 %v485
        %557 = vmatpush.msra.mxu0 %v482
        %558 = vmatpush.msra.mxu0 %v479
        %559 = vmatmul.f32.gmra.mxu0 %v521
        %v560 = vpop.f32.mrf.mxu0
        %v561 = vadd.f32 0.0, %v560
        %562 = vdwg.mxu0
        %563 = vmatpush.msra.mxu0 0.0
        %564 = vmatpush.msra.mxu0 0.0
        %565 = vmatpush.msra.mxu0 0.0
        %566 = vmatpush.msra.mxu0 0.0
        %567 = vmatpush.msra.mxu0 0.0
        %568 = vmatpush.msra.mxu0 0.0
        %569 = vmatpush.msra.mxu0 0.0
        %570 = vmatpush.msra.mxu0 0.0
        %571 = vmatpush.msra.mxu0 0.0
        %572 = vmatpush.msra.mxu0 %v498
        %573 = vmatpush.msra.mxu0 %v495
        %574 = vmatpush.msra.mxu0 %v492
        %575 = vmatpush.msra.mxu0 %v489
        %576 = vmatpush.msra.mxu0 %v486
        %577 = vmatpush.msra.mxu0 %v483
        %578 = vmatpush.msra.mxu0 %v480
        %579 = vmatmul.f32.gmra.mxu0 %v521
        %v580 = vpop.f32.mrf.mxu0
        %v581 = vadd.f32 0.0, %v580
        %582 = vdwg.mxu0
        %v583 = vsel %vm520, %v320, 0
        %585 = vmatpush.msra.mxu0 0.0
        %586 = vmatpush.msra.mxu0 0.0
        %587 = vmatpush.msra.mxu0 0.0
        %588 = vmatpush.msra.mxu0 0.0
        %589 = vmatpush.msra.mxu0 0.0
        %590 = vmatpush.msra.mxu0 0.0
        %591 = vmatpush.msra.mxu0 0.0
        %592 = vmatpush.msra.mxu0 0.0
        %593 = vmatpush.msra.mxu0 0.0
        %594 = vmatpush.msra.mxu0 %v412
        %595 = vmatpush.msra.mxu0 %v397
        %596 = vmatpush.msra.mxu0 %v382
        %597 = vmatpush.msra.mxu0 %v367
        %598 = vmatpush.msra.mxu0 %v352
        %599 = vmatpush.msra.mxu0 %v337
        %600 = vmatpush.msra.mxu0 %v233
        %601 = vmatmul.f32.gmra.mxu0 %v583
        %v602 = vpop.f32.mrf.mxu0
        %v603 = vadd.f32 %v541, %v602
        %604 = vdwg.mxu0
        %605 = vmatpush.msra.mxu0 0.0
        %606 = vmatpush.msra.mxu0 0.0
        %607 = vmatpush.msra.mxu0 0.0
        %608 = vmatpush.msra.mxu0 0.0
        %609 = vmatpush.msra.mxu0 0.0
        %610 = vmatpush.msra.mxu0 0.0
        %611 = vmatpush.msra.mxu0 0.0
        %612 = vmatpush.msra.mxu0 0.0
        %613 = vmatpush.msra.mxu0 0.0
        %614 = vmatpush.msra.mxu0 %v413
        %615 = vmatpush.msra.mxu0 %v398
        %616 = vmatpush.msra.mxu0 %v383
        %617 = vmatpush.msra.mxu0 %v368
        %618 = vmatpush.msra.mxu0 %v353
        %619 = vmatpush.msra.mxu0 %v338
        %620 = vmatpush.msra.mxu0 %v234
        %621 = vmatmul.f32.gmra.mxu0 %v583
        %v622 = vpop.f32.mrf.mxu0
        %v623 = vadd.f32 %v561, %v622
        %624 = vdwg.mxu0
        %625 = vmatpush.msra.mxu0 0.0
        %626 = vmatpush.msra.mxu0 0.0
        %627 = vmatpush.msra.mxu0 0.0
        %628 = vmatpush.msra.mxu0 0.0
        %629 = vmatpush.msra.mxu0 0.0
        %630 = vmatpush.msra.mxu0 0.0
        %631 = vmatpush.msra.mxu0 0.0
        %632 = vmatpush.msra.mxu0 0.0
        %633 = vmatpush.msra.mxu0 0.0
        %634 = vmatpush.msra.mxu0 %v414
        %635 = vmatpush.msra.mxu0 %v399
        %636 = vmatpush.msra.mxu0 %v384
        %637 = vmatpush.msra.mxu0 %v369
        %638 = vmatpush.msra.mxu0 %v354
        %639 = vmatpush.msra.mxu0 %v339
        %640 = vmatpush.msra.mxu0 %v235
        %641 = vmatmul.f32.gmra.mxu0 %v583
        %v642 = vpop.f32.mrf.mxu0
        %v643 = vadd.f32 %v581, %v642
        %644 = vdwg.mxu0
        %646 = vrot.lane.b32.xlu0 %v320, 16
        %v647 = vpop.permute.xlu0 %646
        %648 = vrot.lane.b32.xlu0 %v321, 16
        %v649 = vpop.permute.xlu0 %648
        %vm650 = vcmask 130048
        %v651 = vsel %vm650, %v647, %v649
        %652 = vrot.lane.b32.xlu0 %v233, 84
        %v653 = vpop.permute.xlu0 %652
        %654 = vrot.lane.b32.xlu0 %v234, 84
        %v655 = vpop.permute.xlu0 %654
        %656 = vrot.lane.b32.xlu0 %v235, 84
        %v657 = vpop.permute.xlu0 %656
        %658 = vrot.lane.b32.xlu0 %v236, 84
        %v659 = vpop.permute.xlu0 %658
        %660 = vrot.lane.b32.xlu0 %v337, 84
        %v661 = vpop.permute.xlu0 %660
        %662 = vrot.lane.b32.xlu0 %v338, 84
        %v663 = vpop.permute.xlu0 %662
        %664 = vrot.lane.b32.xlu0 %v339, 84
        %v665 = vpop.permute.xlu0 %664
        %666 = vrot.lane.b32.xlu0 %v335, 84
        %v667 = vpop.permute.xlu0 %666
        %668 = vrot.lane.b32.xlu0 %v352, 84
        %v669 = vpop.permute.xlu0 %668
        %670 = vrot.lane.b32.xlu0 %v353, 84
        %v671 = vpop.permute.xlu0 %670
        %672 = vrot.lane.b32.xlu0 %v354, 84
        %v673 = vpop.permute.xlu0 %672
        %674 = vrot.lane.b32.xlu0 %v350, 84
        %v675 = vpop.permute.xlu0 %674
        %676 = vrot.lane.b32.xlu0 %v367, 84
        %v677 = vpop.permute.xlu0 %676
        %678 = vrot.lane.b32.xlu0 %v368, 84
        %v679 = vpop.permute.xlu0 %678
        %680 = vrot.lane.b32.xlu0 %v369, 84
        %v681 = vpop.permute.xlu0 %680
        %682 = vrot.lane.b32.xlu0 %v365, 84
        %v683 = vpop.permute.xlu0 %682
        %684 = vrot.lane.b32.xlu0 %v382, 84
        %v685 = vpop.permute.xlu0 %684
        %686 = vrot.lane.b32.xlu0 %v383, 84
        %v687 = vpop.permute.xlu0 %686
        %688 = vrot.lane.b32.xlu0 %v384, 84
        %v689 = vpop.permute.xlu0 %688
        %690 = vrot.lane.b32.xlu0 %v380, 84
        %v691 = vpop.permute.xlu0 %690
        %692 = vrot.lane.b32.xlu0 %v397, 84
        %v693 = vpop.permute.xlu0 %692
        %694 = vrot.lane.b32.xlu0 %v398, 84
        %v695 = vpop.permute.xlu0 %694
        %696 = vrot.lane.b32.xlu0 %v399, 84
        %v697 = vpop.permute.xlu0 %696
        %698 = vrot.lane.b32.xlu0 %v395, 84
        %v699 = vpop.permute.xlu0 %698
        %700 = vrot.lane.b32.xlu0 %v412, 84
        %v701 = vpop.permute.xlu0 %700
        %702 = vrot.lane.b32.xlu0 %v413, 84
        %v703 = vpop.permute.xlu0 %702
        %704 = vrot.lane.b32.xlu0 %v414, 84
        %v705 = vpop.permute.xlu0 %704
        %706 = vrot.lane.b32.xlu0 %v410, 84
        %v707 = vpop.permute.xlu0 %706
        %vm708 = vcmask 687104
        %v709 = vsel %vm708, %v653, %v655
        %v710 = vsel %vm708, %v655, %v657
        %v711 = vsel %vm708, %v657, %v659
        %v712 = vsel %vm708, %v661, %v663
        %v713 = vsel %vm708, %v663, %v665
        %v714 = vsel %vm708, %v665, %v667
        %v715 = vsel %vm708, %v669, %v671
        %v716 = vsel %vm708, %v671, %v673
        %v717 = vsel %vm708, %v673, %v675
        %v718 = vsel %vm708, %v677, %v679
        %v719 = vsel %vm708, %v679, %v681
        %v720 = vsel %vm708, %v681, %v683
        %v721 = vsel %vm708, %v685, %v687
        %v722 = vsel %vm708, %v687, %v689
        %v723 = vsel %vm708, %v689, %v691
        %v724 = vsel %vm708, %v693, %v695
        %v725 = vsel %vm708, %v695, %v697
        %v726 = vsel %vm708, %v697, %v699
        %v727 = vsel %vm708, %v701, %v703
        %v728 = vsel %vm708, %v703, %v705
        %v729 = vsel %vm708, %v705, %v707
        %v751 = vsel %vm520, %v651, 0
        %753 = vmatpush.msra.mxu0 0.0
        %754 = vmatpush.msra.mxu0 0.0
        %755 = vmatpush.msra.mxu0 0.0
        %756 = vmatpush.msra.mxu0 0.0
        %757 = vmatpush.msra.mxu0 0.0
        %758 = vmatpush.msra.mxu0 0.0
        %759 = vmatpush.msra.mxu0 0.0
        %760 = vmatpush.msra.mxu0 0.0
        %761 = vmatpush.msra.mxu0 0.0
        %762 = vmatpush.msra.mxu0 %v727
        %763 = vmatpush.msra.mxu0 %v724
        %764 = vmatpush.msra.mxu0 %v721
        %765 = vmatpush.msra.mxu0 %v718
        %766 = vmatpush.msra.mxu0 %v715
        %767 = vmatpush.msra.mxu0 %v712
        %768 = vmatpush.msra.mxu0 %v709
        %769 = vmatmul.f32.gmra.mxu0 %v751
        %v770 = vpop.f32.mrf.mxu0
        %v771 = vadd.f32 0.0, %v770
        %772 = vdwg.mxu0
        %773 = vmatpush.msra.mxu0 0.0
        %774 = vmatpush.msra.mxu0 0.0
        %775 = vmatpush.msra.mxu0 0.0
        %776 = vmatpush.msra.mxu0 0.0
        %777 = vmatpush.msra.mxu0 0.0
        %778 = vmatpush.msra.mxu0 0.0
        %779 = vmatpush.msra.mxu0 0.0
        %780 = vmatpush.msra.mxu0 0.0
        %781 = vmatpush.msra.mxu0 0.0
        %782 = vmatpush.msra.mxu0 %v728
        %783 = vmatpush.msra.mxu0 %v725
        %784 = vmatpush.msra.mxu0 %v722
        %785 = vmatpush.msra.mxu0 %v719
        %786 = vmatpush.msra.mxu0 %v716
        %787 = vmatpush.msra.mxu0 %v713
        %788 = vmatpush.msra.mxu0 %v710
        %789 = vmatmul.f32.gmra.mxu0 %v751
        %v790 = vpop.f32.mrf.mxu0
        %v791 = vadd.f32 0.0, %v790
        %792 = vdwg.mxu0
        %793 = vmatpush.msra.mxu0 0.0
        %794 = vmatpush.msra.mxu0 0.0
        %795 = vmatpush.msra.mxu0 0.0
        %796 = vmatpush.msra.mxu0 0.0
        %797 = vmatpush.msra.mxu0 0.0
        %798 = vmatpush.msra.mxu0 0.0
        %799 = vmatpush.msra.mxu0 0.0
        %800 = vmatpush.msra.mxu0 0.0
        %801 = vmatpush.msra.mxu0 0.0
        %802 = vmatpush.msra.mxu0 %v729
        %803 = vmatpush.msra.mxu0 %v726
        %804 = vmatpush.msra.mxu0 %v723
        %805 = vmatpush.msra.mxu0 %v720
        %806 = vmatpush.msra.mxu0 %v717
        %807 = vmatpush.msra.mxu0 %v714
        %808 = vmatpush.msra.mxu0 %v711
        %809 = vmatmul.f32.gmra.mxu0 %v751
        %v810 = vpop.f32.mrf.mxu0
        %v811 = vadd.f32 0.0, %v810
        %812 = vdwg.mxu0
        %v813 = vadd.f32 %v603, %v771
        %v814 = vadd.f32 %v623, %v791
        %v815 = vadd.f32 %v643, %v811
        %816 = vrot.lane.b32.xlu0 %v321, 88
        %v817 = vpop.permute.xlu0 %816
        %818 = vrot.lane.b32.xlu0 %v233, 62
        %v819 = vpop.permute.xlu0 %818
        %820 = vrot.lane.b32.xlu0 %v234, 62
        %v821 = vpop.permute.xlu0 %820
        %822 = vrot.lane.b32.xlu0 %v235, 62
        %v823 = vpop.permute.xlu0 %822
        %824 = vrot.lane.b32.xlu0 %v236, 62
        %v825 = vpop.permute.xlu0 %824
        %826 = vrot.lane.b32.xlu0 %v337, 62
        %v827 = vpop.permute.xlu0 %826
        %828 = vrot.lane.b32.xlu0 %v338, 62
        %v829 = vpop.permute.xlu0 %828
        %830 = vrot.lane.b32.xlu0 %v339, 62
        %v831 = vpop.permute.xlu0 %830
        %832 = vrot.lane.b32.xlu0 %v335, 62
        %v833 = vpop.permute.xlu0 %832
        %834 = vrot.lane.b32.xlu0 %v352, 62
        %v835 = vpop.permute.xlu0 %834
        %836 = vrot.lane.b32.xlu0 %v353, 62
        %v837 = vpop.permute.xlu0 %836
        %838 = vrot.lane.b32.xlu0 %v354, 62
        %v839 = vpop.permute.xlu0 %838
        %840 = vrot.lane.b32.xlu0 %v350, 62
        %v841 = vpop.permute.xlu0 %840
        %842 = vrot.lane.b32.xlu0 %v367, 62
        %v843 = vpop.permute.xlu0 %842
        %844 = vrot.lane.b32.xlu0 %v368, 62
        %v845 = vpop.permute.xlu0 %844
        %846 = vrot.lane.b32.xlu0 %v369, 62
        %v847 = vpop.permute.xlu0 %846
        %848 = vrot.lane.b32.xlu0 %v365, 62
        %v849 = vpop.permute.xlu0 %848
        %850 = vrot.lane.b32.xlu0 %v382, 62
        %v851 = vpop.permute.xlu0 %850
        %852 = vrot.lane.b32.xlu0 %v383, 62
        %v853 = vpop.permute.xlu0 %852
        %854 = vrot.lane.b32.xlu0 %v384, 62
        %v855 = vpop.permute.xlu0 %854
        %856 = vrot.lane.b32.xlu0 %v380, 62
        %v857 = vpop.permute.xlu0 %856
        %858 = vrot.lane.b32.xlu0 %v397, 62
        %v859 = vpop.permute.xlu0 %858
        %860 = vrot.lane.b32.xlu0 %v398, 62
        %v861 = vpop.permute.xlu0 %860
        %862 = vrot.lane.b32.xlu0 %v399, 62
        %v863 = vpop.permute.xlu0 %862
        %864 = vrot.lane.b32.xlu0 %v395, 62
        %v865 = vpop.permute.xlu0 %864
        %866 = vrot.lane.b32.xlu0 %v412, 62
        %v867 = vpop.permute.xlu0 %866
        %868 = vrot.lane.b32.xlu0 %v413, 62
        %v869 = vpop.permute.xlu0 %868
        %870 = vrot.lane.b32.xlu0 %v414, 62
        %v871 = vpop.permute.xlu0 %870
        %872 = vrot.lane.b32.xlu0 %v410, 62
        %v873 = vpop.permute.xlu0 %872
        %vm874 = vcmask 506880
        %v875 = vsel %vm874, %v819, %v821
        %v876 = vsel %vm874, %v821, %v823
        %v877 = vsel %vm874, %v823, %v825
        %v878 = vsel %vm874, %v827, %v829
        %v879 = vsel %vm874, %v829, %v831
        %v880 = vsel %vm874, %v831, %v833
        %v881 = vsel %vm874, %v835, %v837
        %v882 = vsel %vm874, %v837, %v839
        %v883 = vsel %vm874, %v839, %v841
        %v884 = vsel %vm874, %v843, %v845
        %v885 = vsel %vm874, %v845, %v847
        %v886 = vsel %vm874, %v847, %v849
        %v887 = vsel %vm874, %v851, %v853
        %v888 = vsel %vm874, %v853, %v855
        %v889 = vsel %vm874, %v855, %v857
        %v890 = vsel %vm874, %v859, %v861
        %v891 = vsel %vm874, %v861, %v863
        %v892 = vsel %vm874, %v863, %v865
        %v893 = vsel %vm874, %v867, %v869
        %v894 = vsel %vm874, %v869, %v871
        %v895 = vsel %vm874, %v871, %v873
        %v917 = vsel %vm520, %v817, 0
        %919 = vmatpush.msra.mxu0 0.0
        %920 = vmatpush.msra.mxu0 0.0
        %921 = vmatpush.msra.mxu0 0.0
        %922 = vmatpush.msra.mxu0 0.0
        %923 = vmatpush.msra.mxu0 0.0
        %924 = vmatpush.msra.mxu0 0.0
        %925 = vmatpush.msra.mxu0 0.0
        %926 = vmatpush.msra.mxu0 0.0
        %927 = vmatpush.msra.mxu0 0.0
        %928 = vmatpush.msra.mxu0 %v893
        %929 = vmatpush.msra.mxu0 %v890
        %930 = vmatpush.msra.mxu0 %v887
        %931 = vmatpush.msra.mxu0 %v884
        %932 = vmatpush.msra.mxu0 %v881
        %933 = vmatpush.msra.mxu0 %v878
        %934 = vmatpush.msra.mxu0 %v875
        %935 = vmatmul.f32.gmra.mxu0 %v917
        %v936 = vpop.f32.mrf.mxu0
        %v937 = vadd.f32 0.0, %v936
        %938 = vdwg.mxu0
        %939 = vmatpush.msra.mxu0 0.0
        %940 = vmatpush.msra.mxu0 0.0
        %941 = vmatpush.msra.mxu0 0.0
        %942 = vmatpush.msra.mxu0 0.0
        %943 = vmatpush.msra.mxu0 0.0
        %944 = vmatpush.msra.mxu0 0.0
        %945 = vmatpush.msra.mxu0 0.0
        %946 = vmatpush.msra.mxu0 0.0
        %947 = vmatpush.msra.mxu0 0.0
        %948 = vmatpush.msra.mxu0 %v894
        %949 = vmatpush.msra.mxu0 %v891
        %950 = vmatpush.msra.mxu0 %v888
        %951 = vmatpush.msra.mxu0 %v885
        %952 = vmatpush.msra.mxu0 %v882
        %953 = vmatpush.msra.mxu0 %v879
        %954 = vmatpush.msra.mxu0 %v876
        %955 = vmatmul.f32.gmra.mxu0 %v917
        %v956 = vpop.f32.mrf.mxu0
        %v957 = vadd.f32 0.0, %v956
        %958 = vdwg.mxu0
        %959 = vmatpush.msra.mxu0 0.0
        %960 = vmatpush.msra.mxu0 0.0
        %961 = vmatpush.msra.mxu0 0.0
        %962 = vmatpush.msra.mxu0 0.0
        %963 = vmatpush.msra.mxu0 0.0
        %964 = vmatpush.msra.mxu0 0.0
        %965 = vmatpush.msra.mxu0 0.0
        %966 = vmatpush.msra.mxu0 0.0
        %967 = vmatpush.msra.mxu0 0.0
        %968 = vmatpush.msra.mxu0 %v895
        %969 = vmatpush.msra.mxu0 %v892
        %970 = vmatpush.msra.mxu0 %v889
        %971 = vmatpush.msra.mxu0 %v886
        %972 = vmatpush.msra.mxu0 %v883
        %973 = vmatpush.msra.mxu0 %v880
        %974 = vmatpush.msra.mxu0 %v877
        %975 = vmatmul.f32.gmra.mxu0 %v917
        %v976 = vpop.f32.mrf.mxu0
        %v977 = vadd.f32 0.0, %v976
        %978 = vdwg.mxu0
        %v979 = vadd.f32 %v813, %v937
        %v980 = vadd.f32 %v814, %v957
        %v981 = vadd.f32 %v815, %v977
        %983 = vrot.lane.b32.xlu0 %v321, 32
        %v984 = vpop.permute.xlu0 %983
        %985 = vrot.lane.b32.xlu0 %v322, 32
        %v986 = vpop.permute.xlu0 %985
        %vm987 = vcmask 261120
        %v988 = vsel %vm987, %v984, %v986
        %989 = vrot.lane.b32.xlu0 %v233, 40
        %v990 = vpop.permute.xlu0 %989
        %991 = vrot.lane.b32.xlu0 %v234, 40
        %v992 = vpop.permute.xlu0 %991
        %993 = vrot.lane.b32.xlu0 %v235, 40
        %v994 = vpop.permute.xlu0 %993
        %995 = vrot.lane.b32.xlu0 %v236, 40
        %v996 = vpop.permute.xlu0 %995
        %997 = vrot.lane.b32.xlu0 %v337, 40
        %v998 = vpop.permute.xlu0 %997
        %999 = vrot.lane.b32.xlu0 %v338, 40
        %v1000 = vpop.permute.xlu0 %999
        %1001 = vrot.lane.b32.xlu0 %v339, 40
        %v1002 = vpop.permute.xlu0 %1001
        %1003 = vrot.lane.b32.xlu0 %v335, 40
        %v1004 = vpop.permute.xlu0 %1003
        %1005 = vrot.lane.b32.xlu0 %v352, 40
        %v1006 = vpop.permute.xlu0 %1005
        %1007 = vrot.lane.b32.xlu0 %v353, 40
        %v1008 = vpop.permute.xlu0 %1007
        %1009 = vrot.lane.b32.xlu0 %v354, 40
        %v1010 = vpop.permute.xlu0 %1009
        %1011 = vrot.lane.b32.xlu0 %v350, 40
        %v1012 = vpop.permute.xlu0 %1011
        %1013 = vrot.lane.b32.xlu0 %v367, 40
        %v1014 = vpop.permute.xlu0 %1013
        %1015 = vrot.lane.b32.xlu0 %v368, 40
        %v1016 = vpop.permute.xlu0 %1015
        %1017 = vrot.lane.b32.xlu0 %v369, 40
        %v1018 = vpop.permute.xlu0 %1017
        %1019 = vrot.lane.b32.xlu0 %v365, 40
        %v1020 = vpop.permute.xlu0 %1019
        %1021 = vrot.lane.b32.xlu0 %v382, 40
        %v1022 = vpop.permute.xlu0 %1021
        %1023 = vrot.lane.b32.xlu0 %v383, 40
        %v1024 = vpop.permute.xlu0 %1023
        %1025 = vrot.lane.b32.xlu0 %v384, 40
        %v1026 = vpop.permute.xlu0 %1025
        %1027 = vrot.lane.b32.xlu0 %v380, 40
        %v1028 = vpop.permute.xlu0 %1027
        %1029 = vrot.lane.b32.xlu0 %v397, 40
        %v1030 = vpop.permute.xlu0 %1029
        %1031 = vrot.lane.b32.xlu0 %v398, 40
        %v1032 = vpop.permute.xlu0 %1031
        %1033 = vrot.lane.b32.xlu0 %v399, 40
        %v1034 = vpop.permute.xlu0 %1033
        %1035 = vrot.lane.b32.xlu0 %v395, 40
        %v1036 = vpop.permute.xlu0 %1035
        %1037 = vrot.lane.b32.xlu0 %v412, 40
        %v1038 = vpop.permute.xlu0 %1037
        %1039 = vrot.lane.b32.xlu0 %v413, 40
        %v1040 = vpop.permute.xlu0 %1039
        %1041 = vrot.lane.b32.xlu0 %v414, 40
        %v1042 = vpop.permute.xlu0 %1041
        %1043 = vrot.lane.b32.xlu0 %v410, 40
        %v1044 = vpop.permute.xlu0 %1043
        %vm1045 = vcmask 326656
        %v1046 = vsel %vm1045, %v990, %v992
        %v1047 = vsel %vm1045, %v992, %v994
        %v1048 = vsel %vm1045, %v994, %v996
        %v1049 = vsel %vm1045, %v998, %v1000
        %v1050 = vsel %vm1045, %v1000, %v1002
        %v1051 = vsel %vm1045, %v1002, %v1004
        %v1052 = vsel %vm1045, %v1006, %v1008
        %v1053 = vsel %vm1045, %v1008, %v1010
        %v1054 = vsel %vm1045, %v1010, %v1012
        %v1055 = vsel %vm1045, %v1014, %v1016
        %v1056 = vsel %vm1045, %v1016, %v1018
        %v1057 = vsel %vm1045, %v1018, %v1020
        %v1058 = vsel %vm1045, %v1022, %v1024
        %v1059 = vsel %vm1045, %v1024, %v1026
        %v1060 = vsel %vm1045, %v1026, %v1028
        %v1061 = vsel %vm1045, %v1030, %v1032
        %v1062 = vsel %vm1045, %v1032, %v1034
        %v1063 = vsel %vm1045, %v1034, %v1036
        %v1064 = vsel %vm1045, %v1038, %v1040
        %v1065 = vsel %vm1045, %v1040, %v1042
        %v1066 = vsel %vm1045, %v1042, %v1044
        %v1088 = vsel %vm520, %v988, 0
        %1090 = vmatpush.msra.mxu0 0.0
        %1091 = vmatpush.msra.mxu0 0.0
        %1092 = vmatpush.msra.mxu0 0.0
        %1093 = vmatpush.msra.mxu0 0.0
        %1094 = vmatpush.msra.mxu0 0.0
        %1095 = vmatpush.msra.mxu0 0.0
        %1096 = vmatpush.msra.mxu0 0.0
        %1097 = vmatpush.msra.mxu0 0.0
        %1098 = vmatpush.msra.mxu0 0.0
        %1099 = vmatpush.msra.mxu0 %v1064
        %1100 = vmatpush.msra.mxu0 %v1061
        %1101 = vmatpush.msra.mxu0 %v1058
        %1102 = vmatpush.msra.mxu0 %v1055
        %1103 = vmatpush.msra.mxu0 %v1052
        %1104 = vmatpush.msra.mxu0 %v1049
        %1105 = vmatpush.msra.mxu0 %v1046
        %1106 = vmatmul.f32.gmra.mxu0 %v1088
        %v1107 = vpop.f32.mrf.mxu0
        %v1108 = vadd.f32 0.0, %v1107
        %1109 = vdwg.mxu0
        %1110 = vmatpush.msra.mxu0 0.0
        %1111 = vmatpush.msra.mxu0 0.0
        %1112 = vmatpush.msra.mxu0 0.0
        %1113 = vmatpush.msra.mxu0 0.0
        %1114 = vmatpush.msra.mxu0 0.0
        %1115 = vmatpush.msra.mxu0 0.0
        %1116 = vmatpush.msra.mxu0 0.0
        %1117 = vmatpush.msra.mxu0 0.0
        %1118 = vmatpush.msra.mxu0 0.0
        %1119 = vmatpush.msra.mxu0 %v1065
        %1120 = vmatpush.msra.mxu0 %v1062
        %1121 = vmatpush.msra.mxu0 %v1059
        %1122 = vmatpush.msra.mxu0 %v1056
        %1123 = vmatpush.msra.mxu0 %v1053
        %1124 = vmatpush.msra.mxu0 %v1050
        %1125 = vmatpush.msra.mxu0 %v1047
        %1126 = vmatmul.f32.gmra.mxu0 %v1088
        %v1127 = vpop.f32.mrf.mxu0
        %v1128 = vadd.f32 0.0, %v1127
        %1129 = vdwg.mxu0
        %1130 = vmatpush.msra.mxu0 0.0
        %1131 = vmatpush.msra.mxu0 0.0
        %1132 = vmatpush.msra.mxu0 0.0
        %1133 = vmatpush.msra.mxu0 0.0
        %1134 = vmatpush.msra.mxu0 0.0
        %1135 = vmatpush.msra.mxu0 0.0
        %1136 = vmatpush.msra.mxu0 0.0
        %1137 = vmatpush.msra.mxu0 0.0
        %1138 = vmatpush.msra.mxu0 0.0
        %1139 = vmatpush.msra.mxu0 %v1066
        %1140 = vmatpush.msra.mxu0 %v1063
        %1141 = vmatpush.msra.mxu0 %v1060
        %1142 = vmatpush.msra.mxu0 %v1057
        %1143 = vmatpush.msra.mxu0 %v1054
        %1144 = vmatpush.msra.mxu0 %v1051
        %1145 = vmatpush.msra.mxu0 %v1048
        %1146 = vmatmul.f32.gmra.mxu0 %v1088
        %v1147 = vpop.f32.mrf.mxu0
        %v1148 = vadd.f32 0.0, %v1147
        %1149 = vdwg.mxu0
        %v1150 = vadd.f32 %v979, %v1108
        %v1151 = vadd.f32 %v980, %v1128
        %v1152 = vadd.f32 %v981, %v1148
        %1153 = vrot.lane.b32.xlu0 %v322, 104
        %v1154 = vpop.permute.xlu0 %1153
        %1155 = vrot.lane.b32.xlu0 %v233, 18
        %v1156 = vpop.permute.xlu0 %1155
        %1157 = vrot.lane.b32.xlu0 %v234, 18
        %v1158 = vpop.permute.xlu0 %1157
        %1159 = vrot.lane.b32.xlu0 %v235, 18
        %v1160 = vpop.permute.xlu0 %1159
        %1161 = vrot.lane.b32.xlu0 %v236, 18
        %v1162 = vpop.permute.xlu0 %1161
        %1163 = vrot.lane.b32.xlu0 %v337, 18
        %v1164 = vpop.permute.xlu0 %1163
        %1165 = vrot.lane.b32.xlu0 %v338, 18
        %v1166 = vpop.permute.xlu0 %1165
        %1167 = vrot.lane.b32.xlu0 %v339, 18
        %v1168 = vpop.permute.xlu0 %1167
        %1169 = vrot.lane.b32.xlu0 %v335, 18
        %v1170 = vpop.permute.xlu0 %1169
        %1171 = vrot.lane.b32.xlu0 %v352, 18
        %v1172 = vpop.permute.xlu0 %1171
        %1173 = vrot.lane.b32.xlu0 %v353, 18
        %v1174 = vpop.permute.xlu0 %1173
        %1175 = vrot.lane.b32.xlu0 %v354, 18
        %v1176 = vpop.permute.xlu0 %1175
        %1177 = vrot.lane.b32.xlu0 %v350, 18
        %v1178 = vpop.permute.xlu0 %1177
        %1179 = vrot.lane.b32.xlu0 %v367, 18
        %v1180 = vpop.permute.xlu0 %1179
        %1181 = vrot.lane.b32.xlu0 %v368, 18
        %v1182 = vpop.permute.xlu0 %1181
        %1183 = vrot.lane.b32.xlu0 %v369, 18
        %v1184 = vpop.permute.xlu0 %1183
        %1185 = vrot.lane.b32.xlu0 %v365, 18
        %v1186 = vpop.permute.xlu0 %1185
        %1187 = vrot.lane.b32.xlu0 %v382, 18
        %v1188 = vpop.permute.xlu0 %1187
        %1189 = vrot.lane.b32.xlu0 %v383, 18
        %v1190 = vpop.permute.xlu0 %1189
        %1191 = vrot.lane.b32.xlu0 %v384, 18
        %v1192 = vpop.permute.xlu0 %1191
        %1193 = vrot.lane.b32.xlu0 %v380, 18
        %v1194 = vpop.permute.xlu0 %1193
        %1195 = vrot.lane.b32.xlu0 %v397, 18
        %v1196 = vpop.permute.xlu0 %1195
        %1197 = vrot.lane.b32.xlu0 %v398, 18
        %v1198 = vpop.permute.xlu0 %1197
        %1199 = vrot.lane.b32.xlu0 %v399, 18
        %v1200 = vpop.permute.xlu0 %1199
        %1201 = vrot.lane.b32.xlu0 %v395, 18
        %v1202 = vpop.permute.xlu0 %1201
        %1203 = vrot.lane.b32.xlu0 %v412, 18
        %v1204 = vpop.permute.xlu0 %1203
        %1205 = vrot.lane.b32.xlu0 %v413, 18
        %v1206 = vpop.permute.xlu0 %1205
        %1207 = vrot.lane.b32.xlu0 %v414, 18
        %v1208 = vpop.permute.xlu0 %1207
        %1209 = vrot.lane.b32.xlu0 %v410, 18
        %v1210 = vpop.permute.xlu0 %1209
        %vm1211 = vcmask 146432
        %v1212 = vsel %vm1211, %v1156, %v1158
        %v1213 = vsel %vm1211, %v1158, %v1160
        %v1214 = vsel %vm1211, %v1160, %v1162
        %v1215 = vsel %vm1211, %v1164, %v1166
        %v1216 = vsel %vm1211, %v1166, %v1168
        %v1217 = vsel %vm1211, %v1168, %v1170
        %v1218 = vsel %vm1211, %v1172, %v1174
        %v1219 = vsel %vm1211, %v1174, %v1176
        %v1220 = vsel %vm1211, %v1176, %v1178
        %v1221 = vsel %vm1211, %v1180, %v1182
        %v1222 = vsel %vm1211, %v1182, %v1184
        %v1223 = vsel %vm1211, %v1184, %v1186
        %v1224 = vsel %vm1211, %v1188, %v1190
        %v1225 = vsel %vm1211, %v1190, %v1192
        %v1226 = vsel %vm1211, %v1192, %v1194
        %v1227 = vsel %vm1211, %v1196, %v1198
        %v1228 = vsel %vm1211, %v1198, %v1200
        %v1229 = vsel %vm1211, %v1200, %v1202
        %v1230 = vsel %vm1211, %v1204, %v1206
        %v1231 = vsel %vm1211, %v1206, %v1208
        %v1232 = vsel %vm1211, %v1208, %v1210
        %v1254 = vsel %vm520, %v1154, 0
        %1256 = vmatpush.msra.mxu0 0.0
        %1257 = vmatpush.msra.mxu0 0.0
        %1258 = vmatpush.msra.mxu0 0.0
        %1259 = vmatpush.msra.mxu0 0.0
        %1260 = vmatpush.msra.mxu0 0.0
        %1261 = vmatpush.msra.mxu0 0.0
        %1262 = vmatpush.msra.mxu0 0.0
        %1263 = vmatpush.msra.mxu0 0.0
        %1264 = vmatpush.msra.mxu0 0.0
        %1265 = vmatpush.msra.mxu0 %v1230
        %1266 = vmatpush.msra.mxu0 %v1227
        %1267 = vmatpush.msra.mxu0 %v1224
        %1268 = vmatpush.msra.mxu0 %v1221
        %1269 = vmatpush.msra.mxu0 %v1218
        %1270 = vmatpush.msra.mxu0 %v1215
        %1271 = vmatpush.msra.mxu0 %v1212
        %1272 = vmatmul.f32.gmra.mxu0 %v1254
        %v1273 = vpop.f32.mrf.mxu0
        %v1274 = vadd.f32 0.0, %v1273
        %1275 = vdwg.mxu0
        %1276 = vmatpush.msra.mxu0 0.0
        %1277 = vmatpush.msra.mxu0 0.0
        %1278 = vmatpush.msra.mxu0 0.0
        %1279 = vmatpush.msra.mxu0 0.0
        %1280 = vmatpush.msra.mxu0 0.0
        %1281 = vmatpush.msra.mxu0 0.0
        %1282 = vmatpush.msra.mxu0 0.0
        %1283 = vmatpush.msra.mxu0 0.0
        %1284 = vmatpush.msra.mxu0 0.0
        %1285 = vmatpush.msra.mxu0 %v1231
        %1286 = vmatpush.msra.mxu0 %v1228
        %1287 = vmatpush.msra.mxu0 %v1225
        %1288 = vmatpush.msra.mxu0 %v1222
        %1289 = vmatpush.msra.mxu0 %v1219
        %1290 = vmatpush.msra.mxu0 %v1216
        %1291 = vmatpush.msra.mxu0 %v1213
        %1292 = vmatmul.f32.gmra.mxu0 %v1254
        %v1293 = vpop.f32.mrf.mxu0
        %v1294 = vadd.f32 0.0, %v1293
        %1295 = vdwg.mxu0
        %1296 = vmatpush.msra.mxu0 0.0
        %1297 = vmatpush.msra.mxu0 0.0
        %1298 = vmatpush.msra.mxu0 0.0
        %1299 = vmatpush.msra.mxu0 0.0
        %1300 = vmatpush.msra.mxu0 0.0
        %1301 = vmatpush.msra.mxu0 0.0
        %1302 = vmatpush.msra.mxu0 0.0
        %1303 = vmatpush.msra.mxu0 0.0
        %1304 = vmatpush.msra.mxu0 0.0
        %1305 = vmatpush.msra.mxu0 %v1232
        %1306 = vmatpush.msra.mxu0 %v1229
        %1307 = vmatpush.msra.mxu0 %v1226
        %1308 = vmatpush.msra.mxu0 %v1223
        %1309 = vmatpush.msra.mxu0 %v1220
        %1310 = vmatpush.msra.mxu0 %v1217
        %1311 = vmatpush.msra.mxu0 %v1214
        %1312 = vmatmul.f32.gmra.mxu0 %v1254
        %v1313 = vpop.f32.mrf.mxu0
        %v1314 = vadd.f32 0.0, %v1313
        %1315 = vdwg.mxu0
        %v1316 = vadd.f32 %v1150, %v1274
        %v1317 = vadd.f32 %v1151, %v1294
        %v1318 = vadd.f32 %v1152, %v1314
        %1320 = vrot.lane.b32.xlu0 %v237, 127
        %v1321 = vpop.permute.xlu0 %1320
        %v1322 = vsel %vm336, %v335, %v1321
        %1323 = vrot.lane.b32.xlu0 %v237, 126
        %v1324 = vpop.permute.xlu0 %1323
        %v1325 = vsel %vm351, %v350, %v1324
        %1326 = vrot.lane.b32.xlu0 %v237, 125
        %v1327 = vpop.permute.xlu0 %1326
        %v1328 = vsel %vm366, %v365, %v1327
        %1329 = vrot.lane.b32.xlu0 %v237, 124
        %v1330 = vpop.permute.xlu0 %1329
        %v1331 = vsel %vm381, %v380, %v1330
        %1332 = vrot.lane.b32.xlu0 %v237, 123
        %v1333 = vpop.permute.xlu0 %1332
        %v1334 = vsel %vm396, %v395, %v1333
        %1335 = vrot.lane.b32.xlu0 %v237, 122
        %v1336 = vpop.permute.xlu0 %1335
        %v1337 = vsel %vm411, %v410, %v1336
        %1339 = vrot.lane.b32.xlu0 %v322, 48
        %v1340 = vpop.permute.xlu0 %1339
        %1341 = vrot.lane.b32.xlu0 %v323, 48
        %v1342 = vpop.permute.xlu0 %1341
        %vm1343 = vcmask 392192
        %v1344 = vsel %vm1343, %v1340, %v1342
        %1345 = vrot.lane.b32.xlu0 %v338, 124
        %v1346 = vpop.permute.xlu0 %1345
        %1347 = vrot.lane.b32.xlu0 %v339, 124
        %v1348 = vpop.permute.xlu0 %1347
        %1349 = vrot.lane.b32.xlu0 %v1322, 124
        %v1350 = vpop.permute.xlu0 %1349
        %1351 = vrot.lane.b32.xlu0 %v1321, 124
        %v1352 = vpop.permute.xlu0 %1351
        %1353 = vrot.lane.b32.xlu0 %v353, 124
        %v1354 = vpop.permute.xlu0 %1353
        %1355 = vrot.lane.b32.xlu0 %v354, 124
        %v1356 = vpop.permute.xlu0 %1355
        %1357 = vrot.lane.b32.xlu0 %v1325, 124
        %v1358 = vpop.permute.xlu0 %1357
        %1359 = vrot.lane.b32.xlu0 %v1324, 124
        %v1360 = vpop.permute.xlu0 %1359
        %1361 = vrot.lane.b32.xlu0 %v368, 124
        %v1362 = vpop.permute.xlu0 %1361
        %1363 = vrot.lane.b32.xlu0 %v369, 124
        %v1364 = vpop.permute.xlu0 %1363
        %1365 = vrot.lane.b32.xlu0 %v1328, 124
        %v1366 = vpop.permute.xlu0 %1365
        %1367 = vrot.lane.b32.xlu0 %v1327, 124
        %v1368 = vpop.permute.xlu0 %1367
        %1369 = vrot.lane.b32.xlu0 %v383, 124
        %v1370 = vpop.permute.xlu0 %1369
        %1371 = vrot.lane.b32.xlu0 %v384, 124
        %v1372 = vpop.permute.xlu0 %1371
        %1373 = vrot.lane.b32.xlu0 %v1331, 124
        %v1374 = vpop.permute.xlu0 %1373
        %1375 = vrot.lane.b32.xlu0 %v1330, 124
        %v1376 = vpop.permute.xlu0 %1375
        %1377 = vrot.lane.b32.xlu0 %v398, 124
        %v1378 = vpop.permute.xlu0 %1377
        %1379 = vrot.lane.b32.xlu0 %v399, 124
        %v1380 = vpop.permute.xlu0 %1379
        %1381 = vrot.lane.b32.xlu0 %v1334, 124
        %v1382 = vpop.permute.xlu0 %1381
        %1383 = vrot.lane.b32.xlu0 %v1333, 124
        %v1384 = vpop.permute.xlu0 %1383
        %1385 = vrot.lane.b32.xlu0 %v413, 124
        %v1386 = vpop.permute.xlu0 %1385
        %1387 = vrot.lane.b32.xlu0 %v414, 124
        %v1388 = vpop.permute.xlu0 %1387
        %1389 = vrot.lane.b32.xlu0 %v1337, 124
        %v1390 = vpop.permute.xlu0 %1389
        %1391 = vrot.lane.b32.xlu0 %v1336, 124
        %v1392 = vpop.permute.xlu0 %1391
        %v1393 = vsel %vm381, %v1346, %v1348
        %v1394 = vsel %vm381, %v1348, %v1350
        %v1395 = vsel %vm381, %v1350, %v1352
        %v1396 = vsel %vm381, %v1354, %v1356
        %v1397 = vsel %vm381, %v1356, %v1358
        %v1398 = vsel %vm381, %v1358, %v1360
        %v1399 = vsel %vm381, %v1362, %v1364
        %v1400 = vsel %vm381, %v1364, %v1366
        %v1401 = vsel %vm381, %v1366, %v1368
        %v1402 = vsel %vm381, %v1370, %v1372
        %v1403 = vsel %vm381, %v1372, %v1374
        %v1404 = vsel %vm381, %v1374, %v1376
        %v1405 = vsel %vm381, %v1378, %v1380
        %v1406 = vsel %vm381, %v1380, %v1382
        %v1407 = vsel %vm381, %v1382, %v1384
        %v1408 = vsel %vm381, %v1386, %v1388
        %v1409 = vsel %vm381, %v1388, %v1390
        %v1410 = vsel %vm381, %v1390, %v1392
        %v1430 = vsel %vm520, %v1344, 0
        %1432 = vmatpush.msra.mxu0 0.0
        %1433 = vmatpush.msra.mxu0 0.0
        %1434 = vmatpush.msra.mxu0 0.0
        %1435 = vmatpush.msra.mxu0 0.0
        %1436 = vmatpush.msra.mxu0 0.0
        %1437 = vmatpush.msra.mxu0 0.0
        %1438 = vmatpush.msra.mxu0 0.0
        %1439 = vmatpush.msra.mxu0 0.0
        %1440 = vmatpush.msra.mxu0 0.0
        %1441 = vmatpush.msra.mxu0 %v1408
        %1442 = vmatpush.msra.mxu0 %v1405
        %1443 = vmatpush.msra.mxu0 %v1402
        %1444 = vmatpush.msra.mxu0 %v1399
        %1445 = vmatpush.msra.mxu0 %v1396
        %1446 = vmatpush.msra.mxu0 %v1393
        %1447 = vmatpush.msra.mxu0 %v383
        %1448 = vmatmul.f32.gmra.mxu0 %v1430
        %v1449 = vpop.f32.mrf.mxu0
        %v1450 = vadd.f32 0.0, %v1449
        %1451 = vdwg.mxu0
        %1452 = vmatpush.msra.mxu0 0.0
        %1453 = vmatpush.msra.mxu0 0.0
        %1454 = vmatpush.msra.mxu0 0.0
        %1455 = vmatpush.msra.mxu0 0.0
        %1456 = vmatpush.msra.mxu0 0.0
        %1457 = vmatpush.msra.mxu0 0.0
        %1458 = vmatpush.msra.mxu0 0.0
        %1459 = vmatpush.msra.mxu0 0.0
        %1460 = vmatpush.msra.mxu0 0.0
        %1461 = vmatpush.msra.mxu0 %v1409
        %1462 = vmatpush.msra.mxu0 %v1406
        %1463 = vmatpush.msra.mxu0 %v1403
        %1464 = vmatpush.msra.mxu0 %v1400
        %1465 = vmatpush.msra.mxu0 %v1397
        %1466 = vmatpush.msra.mxu0 %v1394
        %1467 = vmatpush.msra.mxu0 %v384
        %1468 = vmatmul.f32.gmra.mxu0 %v1430
        %v1469 = vpop.f32.mrf.mxu0
        %v1470 = vadd.f32 0.0, %v1469
        %1471 = vdwg.mxu0
        %1472 = vmatpush.msra.mxu0 0.0
        %1473 = vmatpush.msra.mxu0 0.0
        %1474 = vmatpush.msra.mxu0 0.0
        %1475 = vmatpush.msra.mxu0 0.0
        %1476 = vmatpush.msra.mxu0 0.0
        %1477 = vmatpush.msra.mxu0 0.0
        %1478 = vmatpush.msra.mxu0 0.0
        %1479 = vmatpush.msra.mxu0 0.0
        %1480 = vmatpush.msra.mxu0 0.0
        %1481 = vmatpush.msra.mxu0 %v1410
        %1482 = vmatpush.msra.mxu0 %v1407
        %1483 = vmatpush.msra.mxu0 %v1404
        %1484 = vmatpush.msra.mxu0 %v1401
        %1485 = vmatpush.msra.mxu0 %v1398
        %1486 = vmatpush.msra.mxu0 %v1395
        %1487 = vmatpush.msra.mxu0 %v1331
        %1488 = vmatmul.f32.gmra.mxu0 %v1430
        %v1489 = vpop.f32.mrf.mxu0
        %v1490 = vadd.f32 0.0, %v1489
        %1491 = vdwg.mxu0
        %v1492 = vadd.f32 %v1316, %v1450
        %v1493 = vadd.f32 %v1317, %v1470
        %v1494 = vadd.f32 %v1318, %v1490
        %1495 = vst [vmem:[%s232] sm:$0xff] %v1492
        %1496 = vst [vmem:[%s232 + $0x8] sm:$0xff] %v1493
        %1497 = vst [vmem:[%s232 + $0x10] sm:$0xff] %v1494
        %s1498 = sand.u32 %s119, 1
        %s1499 = scalar_lea.sflag [#allocation4], %s1498
        %s1500 = sand.u32 %s119, 1
        %s1501 = smul.addr %s1500, 24
        %s1502 = scalar_lea.vmem [#allocation7], %s1501
        // Predicated region
        $region45: #{tpu_custom_call.1} parent=35 // pred_check
          %p1503 = pneg %p129
        $region46: #{tpu_custom_call.1} parent=35 // pred_check_branch
          %1505 = sbr.rel (%p1503) target = $region48
        $region47: #{tpu_custom_call.1} parent=35 // pred_region
          %1507 = vsyncadd %s1499, 0
          %s1508 = smul.addr %s22, 3
          %s1509 = smul.addr %s1508, 8
          %s1510 = scalar_lea.hbm %s4, %s1509
          %s1512 = sshll.u32 %s1502, 4
          %s1513 = int_to_ptr.vmem [resolvable:$true] %s1512
          %s1514 = sshll.u32 %s1510, 4
          %s1515 = int_to_ptr.hbm [resolvable:$true] %s1514
          %1517 = dma.vmem_to_hbm [thread:$0]  %s1513, 384, %s1515, %s1499
        $region48: #{tpu_custom_call.1} parent=35 // pred_fallthru
          _
      $region36: #{tpu_custom_call.1} parent=5 // pred_fallthru
        _
      %p1518 = scmp.le.s32.totalorder 2, %s17
      // Predicated region
      $region49: #{tpu_custom_call.1} parent=5 // pred_check
        %p1519 = pneg %p1518
      $region50: #{tpu_custom_call.1} parent=5 // pred_check_branch
        %1521 = sbr.rel (%p1519) target = $region52
      $region51: #{tpu_custom_call.1} parent=5 // pred_region
        %s1522 = ssub.s32 %s17, 2
        // Predicated region
        $region53: #{tpu_custom_call.1} parent=51 // pred_check
          %p1523 = pneg %p135
        $region54: #{tpu_custom_call.1} parent=51 // pred_check_branch
          %1525 = sbr.rel (%p1523) target = $region56
        $region55: #{tpu_custom_call.1} parent=51 // pred_region
          %s1526 = sand.u32 %s120, 1
          %s1527 = scalar_lea.sflag [#allocation4], %s1526
          %s1528 = sand.u32 %s120, 1
          %s1529 = smul.addr %s1528, 24
          %s1530 = scalar_lea.vmem [#allocation7], %s1529
          %1532 = dma.done %s1527, 384
        $region56: #{tpu_custom_call.1} parent=51 // pred_fallthru
          _
      $region52: #{tpu_custom_call.1} parent=5 // pred_fallthru
        _
    $region6: #{tpu_custom_call.1} parent=1 // loop_footer
      %s21 = sadd.s32 1, %s17
    $region7: #{tpu_custom_call.1} parent=1 // loop_footer_branch
      %16 = sbr.rel target = $region3
    $region8: #{tpu_custom_call.1} parent=1 // loop_exit
      _
    %1533 = vsyncpa [#allocation3], 1
    %s1534 = scalar_lea.sflag [#allocation3], 1
    %1535 = vsyncpa %s1534, 1
    %1536 = vsyncpa [#allocation6], 1
    %1537 = vsyncpa [#allocation4], 1
    %s1538 = scalar_lea.sflag [#allocation4], 1
    %1539 = vsyncpa %s1538, 1

</llo_original>
